<compile_context>
chip_gen: v5e
topology: v5e:2x2
jax: 0.10.0
libtpu: 0.0.40
codegen_flags: <defaults>
</compile_context>

<pallas_src>
import functools
import jax
import jax.numpy as jnp
from jax import lax
from jax.experimental import pallas as pl
from jax.experimental.pallas import tpu as pltpu  # noqa: F401  (kept for TPU backend import)


def _lstm_fused_kernel(add_ref, mask_ref, wf_ref, out_ref, *, n_iters, batch,
                       hidden_dim):
    B, H = batch, hidden_dim
    H2 = 2 * H

    wf = wf_ref[...]                     # (2H, 8H) recurrent weight (f32 or bf16)

    def step(j, carry):
        # carry entering iteration j:  h_pk = [h0(j-1) | h1(j-2)],  c_pk likewise.
        h_pk, c_pk = carry

        # Single fused MXU push per step: columns [i0 i1 f0 f1 g0 g1 o0 o1].
        fused = jnp.dot(h_pk.astype(wf.dtype), wf,
                        preferred_element_type=jnp.float32)       # (B, 8H) f32
        gates = fused + add_ref[j]       # + [pre0[j] | b1] in interleaved layout

        # One full-width sigmoid (covers i,f,o of both layers); tanh only on g.
        sg = jax.nn.sigmoid(gates)
        i_pk = sg[:, 0 * H2:1 * H2]                  # (B,2H) = [i0 | i1]
        f_pk = sg[:, 1 * H2:2 * H2]                  # (B,2H) = [f0 | f1]
        g_pk = jnp.tanh(gates[:, 2 * H2:3 * H2])     # (B,2H) = [g0 | g1]
        o_pk = sg[:, 3 * H2:4 * H2]                  # (B,2H) = [o0 | o1]

        # Packed cell update for both layers at once (all ops full (B,2H)).
        c_new = f_pk * c_pk + i_pk * g_pk
        h_new = o_pk * jnp.tanh(c_new)

        # Precomputed packed mask: left half = (j < len), right = (j-1 < len).
        keep = mask_ref[j] != 0.0
        h_pk = jnp.where(keep, h_new, h_pk)
        c_pk = jnp.where(keep, c_new, c_pk)
        return (h_pk, c_pk)

    z = jnp.zeros((B, H2), jnp.float32)
    # Small static trip count -> full unroll (LLO gets full lookahead).
    h_pk, _ = lax.fori_loop(0, n_iters, step, (z, z), unroll=True)

    # After the last iteration h_pk = [h0(T) | h1(T-1)]; ht[-1] is the right half.
    out_ref[...] = h_pk[:, H:H2]


def variable_length_lstm(tokens, lengths, params, hidden_dim, *,
                         matmul_dtype=jnp.float32):
    H = hidden_dim
    # Embedding lookup is pure gather glue -> plain JAX/XLA.
    x_emb = params["embedding"][tokens]                        # (B, T, E)
    B, T, E = x_emb.shape

    # Hoisted layer-0 input projection: one (T*B,E)x(E,4H) matmul for all t.
    x_tm = jnp.transpose(x_emb, (1, 0, 2)).reshape(T * B, E)   # time-major
    pre0 = (x_tm @ params["w_ih0"] + params["b0"]).reshape(T, B, 4 * H)

    # ---- fused, gate-interleaved recurrent weight (2H, 8H) --------------------
    # rows = [h0 ; h1]; column blocks (H wide) = [i0 i1 f0 f1 g0 g1 o0 o1],
    # layer-0 blocks from [W_hh0 ; 0], layer-1 blocks from [W_ih1 ; W_hh1].
    zeros_h = jnp.zeros((H, H), jnp.float32)
    cols = []
    for k in range(4):                                   # gate order i, f, g, o
        sl = slice(k * H, (k + 1) * H)
        cols.append(jnp.concatenate([params["w_hh0"][:, sl], zeros_h], axis=0))
        cols.append(jnp.concatenate([params["w_ih1"][:, sl],
                                     params["w_hh1"][:, sl]], axis=0))
    w_fused = jnp.concatenate(cols, axis=1).astype(matmul_dtype)   # (2H, 8H)

    # ---- per-iteration additive term (T+1, B, 8H), same interleaved layout ---
    # layer-0 blocks: pre0[j] (zeros on the final, fully masked iteration);
    # layer-1 blocks: layer-1 bias.
    pre0_ext = jnp.concatenate([pre0, jnp.zeros((1, B, 4 * H), pre0.dtype)],
                               axis=0)                                # (T+1,B,4H)
    b1_ext = jnp.broadcast_to(params["b1"].reshape(1, 1, 4 * H),
                              (T + 1, B, 4 * H))
    parts = []
    for k in range(4):
        sl = slice(k * H, (k + 1) * H)
        parts.append(pre0_ext[..., sl])
        parts.append(b1_ext[..., sl])
    addend = jnp.concatenate(parts, axis=-1)                          # (T+1,B,8H)

    # ---- precomputed packed update masks (T+1, B, 2H) ------------------------
    # iteration j updates layer-0 step j (left half) and layer-1 step j-1
    # (right half); j=0's layer-1 "step -1" and j=T's layer-0 "step T" are off.
    j_ids = jnp.arange(T + 1, dtype=jnp.int32).reshape(T + 1, 1, 1)
    len_b = lengths.astype(jnp.int32).reshape(1, B, 1)
    m0 = j_ids < len_b
    m1 = jnp.logical_and(j_ids >= 1, (j_ids - 1) < len_b)
    mask_pk = jnp.concatenate(
        [jnp.broadcast_to(m0, (T + 1, B, H)),
         jnp.broadcast_to(m1, (T + 1, B, H))], axis=-1).astype(jnp.float32)

    kernel = functools.partial(_lstm_fused_kernel, n_iters=T + 1, batch=B,
                               hidden_dim=H)

    h_final = pl.pallas_call(
        kernel,
        out_shape=jax.ShapeDtypeStruct((B, H), jnp.float32),
        grid=(1,),
        in_specs=[
            pl.BlockSpec((T + 1, B, 8 * H), lambda i: (0, 0, 0)),  # addend
            pl.BlockSpec((T + 1, B, 2 * H), lambda i: (0, 0, 0)),  # packed masks
            pl.BlockSpec((2 * H, 8 * H), lambda i: (0, 0)),        # fused weight
        ],
        out_specs=pl.BlockSpec((B, H), lambda i: (0, 0)),
    )(addend, mask_pk, w_fused)

    # TODO(synk): classifier (H,1) matmul + embedding gather stay in XLA
    # (worst-case MXU shape / pure gather); not worth a Pallas kernel.
    return h_final @ params["w_cls"] + params["b_cls"]


def reference(tokens, lengths, params, H):
    # Pure-JAX reference with pack_padded_sequence-equivalent masking.
    x = params["embedding"][tokens]
    B, T, _ = x.shape

    def cell(x_t, h, c, w_ih, w_hh, b):
        gates = x_t @ w_ih + h @ w_hh + b
        i, f, g, o = jnp.split(gates, 4, axis=-1)
        c_new = jax.nn.sigmoid(f) * c + jax.nn.sigmoid(i) * jnp.tanh(g)
        h_new = jax.nn.sigmoid(o) * jnp.tanh(c_new)
        return h_new, c_new

    h0 = jnp.zeros((B, H)); c0 = jnp.zeros((B, H))
    h1 = jnp.zeros((B, H)); c1 = jnp.zeros((B, H))
    for t in range(T):
        mask = (t < lengths).reshape(B, 1)
        hn, cn = cell(x[:, t], h0, c0, params["w_ih0"], params["w_hh0"], params["b0"])
        h0 = jnp.where(mask, hn, h0); c0 = jnp.where(mask, cn, c0)
        hn, cn = cell(h0, h1, c1, params["w_ih1"], params["w_hh1"], params["b1"])
        h1 = jnp.where(mask, hn, h1); c1 = jnp.where(mask, cn, c1)
    return h1 @ params["w_cls"] + params["b_cls"]


def make_params(key, vocab=6, E=10, H=32):
    ks = jax.random.split(key, 11)
    s = 1.0 / jnp.sqrt(H)
    u = lambda k, shape: jax.random.uniform(k, shape, jnp.float32, -s, s)
    return {
        "embedding": jax.random.normal(ks[0], (vocab, E), jnp.float32),
        "w_ih0": u(ks[1], (E, 4 * H)),
        "w_hh0": u(ks[2], (H, 4 * H)),
        "b0":    u(ks[3], (1, 4 * H)) + u(ks[4], (1, 4 * H)),   # b_ih + b_hh fused
        "w_ih1": u(ks[5], (H, 4 * H)),
        "w_hh1": u(ks[6], (H, 4 * H)),
        "b1":    u(ks[7], (1, 4 * H)) + u(ks[8], (1, 4 * H)),
        "w_cls": u(ks[9], (H, 1)),
        "b_cls": u(ks[10], (1, 1)),
    }


if __name__ == "__main__":
    B, T, H, E, VOCAB = 4, 8, 32, 10, 6
    key = jax.random.PRNGKey(0)
    k_tok, k_par = jax.random.split(key)

    tokens = jax.random.randint(k_tok, (B, T), 0, VOCAB, dtype=jnp.int32)
    lengths = jnp.array([8, 5, 3, 6], dtype=jnp.int32)
    params = make_params(k_par, VOCAB, E, H)

    ref = reference(tokens, lengths, params, H)

    # f32 MXU-operand path: tight check against the pure-JAX reference.
    out = jax.block_until_ready(variable_length_lstm(tokens, lengths, params, H))
    assert out.shape == (B, 1)
    assert jnp.allclose(out, ref, atol=1e-4, rtol=1e-4), (out, ref)

    # bf16 MXU-operand fast path (v6e/v7x): f32 accumulation/state, so only the
    # dot inputs are quantized -> loose tolerance.
    out_bf16 = jax.block_until_ready(
        variable_length_lstm(tokens, lengths, params, H,
                             matmul_dtype=jnp.bfloat16))
    assert jnp.allclose(out_bf16, ref, atol=5e-2, rtol=5e-2), (out_bf16, ref)

    print("KERNEL_OK")
</pallas_src>

<mosaic_0001>
module attributes {stable_mosaic.version = 11 : i64} {
  func.func @_lstm_fused_kernel(%arg0: i32, %arg1: memref<9x4x256xf32, #tpu.memory_space<vmem>>, %arg2: memref<9x4x64xf32, #tpu.memory_space<vmem>>, %arg3: memref<64x256xf32, #tpu.memory_space<vmem>>, %arg4: memref<4x32xf32, #tpu.memory_space<vmem>>) attributes {dimension_semantics = [#tpu.dimension_semantics<arbitrary>], iteration_bounds = array<i64: 1>, scalar_prefetch = 0 : i64, scratch_operands = 0 : i64, tpu.core_type = #tpu.core_type<tc>, window_params = [{pipeline_mode = #tpu.pipeline_mode<synchronous>, transform_indices = @transform_0, window_bounds = array<i64: 9, 4, 256>}, {pipeline_mode = #tpu.pipeline_mode<synchronous>, transform_indices = @transform_1, window_bounds = array<i64: 9, 4, 64>}, {pipeline_mode = #tpu.pipeline_mode<synchronous>, transform_indices = @transform_2, window_bounds = array<i64: 64, 256>}, {pipeline_mode = #tpu.pipeline_mode<synchronous>, transform_indices = @transform_3, window_bounds = array<i64: 4, 32>}]} {
    %c0 = arith.constant 0 : index
    %c0_0 = arith.constant 0 : index
    %0 = vector.load %arg3[%c0, %c0_0] : memref<64x256xf32, #tpu.memory_space<vmem>>, vector<64x256xf32>
    %cst = arith.constant 0.000000e+00 : f32
    %1 = vector.broadcast %cst : f32 to vector<4x64xf32>
    %c0_i32 = arith.constant 0 : i32
    %cst_1 = arith.constant dense<0.000000e+00> : vector<4x256xf32>
    %2 = tpu.matmul %1, %0, %cst_1 {dimension_numbers = #tpu.dot_dimension_numbers<[1], [0], [0], [1], [0, 0, 1, 1], [], []>} : vector<4x64xf32>, vector<64x256xf32>, vector<4x256xf32> -> vector<4x256xf32>
    %3 = arith.index_cast %c0_i32 : i32 to index
    %c0_2 = arith.constant 0 : index
    %c0_3 = arith.constant 0 : index
    %4 = vector.load %arg1[%3, %c0_2, %c0_3] : memref<9x4x256xf32, #tpu.memory_space<vmem>>, vector<1x4x256xf32>
    %5 = vector.shape_cast %4 : vector<1x4x256xf32> to vector<4x256xf32>
    %6 = arith.addf %2, %5 : vector<4x256xf32>
    %7 = arith.negf %6 : vector<4x256xf32>
    %8 = math.exp %7 : vector<4x256xf32>
    %cst_4 = arith.constant 1.000000e+00 : f32
    %9 = vector.broadcast %cst_4 : f32 to vector<4x256xf32>
    %10 = arith.addf %9, %8 : vector<4x256xf32>
    %11 = arith.divf %9, %10 : vector<4x256xf32>
    %12 = vector.extract_strided_slice %11 {offsets = [0, 0], sizes = [4, 64], strides = [1, 1]} : vector<4x256xf32> to vector<4x64xf32>
    %13 = vector.extract_strided_slice %11 {offsets = [0, 64], sizes = [4, 64], strides = [1, 1]} : vector<4x256xf32> to vector<4x64xf32>
    %14 = vector.extract_strided_slice %6 {offsets = [0, 128], sizes = [4, 64], strides = [1, 1]} : vector<4x256xf32> to vector<4x64xf32>
    %15 = math.tanh %14 : vector<4x64xf32>
    %16 = vector.extract_strided_slice %11 {offsets = [0, 192], sizes = [4, 64], strides = [1, 1]} : vector<4x256xf32> to vector<4x64xf32>
    %17 = arith.mulf %13, %1 : vector<4x64xf32>
    %18 = arith.mulf %12, %15 : vector<4x64xf32>
    %19 = arith.addf %17, %18 : vector<4x64xf32>
    %20 = math.tanh %19 : vector<4x64xf32>
    %21 = arith.mulf %16, %20 : vector<4x64xf32>
    %22 = arith.index_cast %c0_i32 : i32 to index
    %c0_5 = arith.constant 0 : index
    %c0_6 = arith.constant 0 : index
    %23 = vector.load %arg2[%22, %c0_5, %c0_6] : memref<9x4x64xf32, #tpu.memory_space<vmem>>, vector<1x4x64xf32>
    %24 = vector.shape_cast %23 : vector<1x4x64xf32> to vector<4x64xf32>
    %cst_7 = arith.constant 0.000000e+00 : f32
    %25 = vector.broadcast %cst_7 : f32 to vector<4x64xf32>
    %26 = arith.cmpf one, %24, %25 : vector<4x64xf32>
    %27 = arith.select %26, %21, %1 : vector<4x64xi1>, vector<4x64xf32>
    %28 = arith.select %26, %19, %1 : vector<4x64xi1>, vector<4x64xf32>
    %c1_i32 = arith.constant 1 : i32
    %cst_8 = arith.constant dense<0.000000e+00> : vector<4x256xf32>
    %29 = tpu.matmul %27, %0, %cst_8 {dimension_numbers = #tpu.dot_dimension_numbers<[1], [0], [0], [1], [0, 0, 1, 1], [], []>} : vector<4x64xf32>, vector<64x256xf32>, vector<4x256xf32> -> vector<4x256xf32>
    %30 = arith.index_cast %c1_i32 : i32 to index
    %c0_9 = arith.constant 0 : index
    %c0_10 = arith.constant 0 : index
    %31 = vector.load %arg1[%30, %c0_9, %c0_10] : memref<9x4x256xf32, #tpu.memory_space<vmem>>, vector<1x4x256xf32>
    %32 = vector.shape_cast %31 : vector<1x4x256xf32> to vector<4x256xf32>
    %33 = arith.addf %29, %32 : vector<4x256xf32>
    %34 = arith.negf %33 : vector<4x256xf32>
    %35 = math.exp %34 : vector<4x256xf32>
    %cst_11 = arith.constant 1.000000e+00 : f32
    %36 = vector.broadcast %cst_11 : f32 to vector<4x256xf32>
    %37 = arith.addf %36, %35 : vector<4x256xf32>
    %38 = arith.divf %36, %37 : vector<4x256xf32>
    %39 = vector.extract_strided_slice %38 {offsets = [0, 0], sizes = [4, 64], strides = [1, 1]} : vector<4x256xf32> to vector<4x64xf32>
    %40 = vector.extract_strided_slice %38 {offsets = [0, 64], sizes = [4, 64], strides = [1, 1]} : vector<4x256xf32> to vector<4x64xf32>
    %41 = vector.extract_strided_slice %33 {offsets = [0, 128], sizes = [4, 64], strides = [1, 1]} : vector<4x256xf32> to vector<4x64xf32>
    %42 = math.tanh %41 : vector<4x64xf32>
    %43 = vector.extract_strided_slice %38 {offsets = [0, 192], sizes = [4, 64], strides = [1, 1]} : vector<4x256xf32> to vector<4x64xf32>
    %44 = arith.mulf %40, %28 : vector<4x64xf32>
    %45 = arith.mulf %39, %42 : vector<4x64xf32>
    %46 = arith.addf %44, %45 : vector<4x64xf32>
    %47 = math.tanh %46 : vector<4x64xf32>
    %48 = arith.mulf %43, %47 : vector<4x64xf32>
    %49 = arith.index_cast %c1_i32 : i32 to index
    %c0_12 = arith.constant 0 : index
    %c0_13 = arith.constant 0 : index
    %50 = vector.load %arg2[%49, %c0_12, %c0_13] : memref<9x4x64xf32, #tpu.memory_space<vmem>>, vector<1x4x64xf32>
    %51 = vector.shape_cast %50 : vector<1x4x64xf32> to vector<4x64xf32>
    %cst_14 = arith.constant 0.000000e+00 : f32
    %52 = vector.broadcast %cst_14 : f32 to vector<4x64xf32>
    %53 = arith.cmpf one, %51, %52 : vector<4x64xf32>
    %54 = arith.select %53, %48, %27 : vector<4x64xi1>, vector<4x64xf32>
    %55 = arith.select %53, %46, %28 : vector<4x64xi1>, vector<4x64xf32>
    %c2_i32 = arith.constant 2 : i32
    %cst_15 = arith.constant dense<0.000000e+00> : vector<4x256xf32>
    %56 = tpu.matmul %54, %0, %cst_15 {dimension_numbers = #tpu.dot_dimension_numbers<[1], [0], [0], [1], [0, 0, 1, 1], [], []>} : vector<4x64xf32>, vector<64x256xf32>, vector<4x256xf32> -> vector<4x256xf32>
    %57 = arith.index_cast %c2_i32 : i32 to index
    %c0_16 = arith.constant 0 : index
    %c0_17 = arith.constant 0 : index
    %58 = vector.load %arg1[%57, %c0_16, %c0_17] : memref<9x4x256xf32, #tpu.memory_space<vmem>>, vector<1x4x256xf32>
    %59 = vector.shape_cast %58 : vector<1x4x256xf32> to vector<4x256xf32>
    %60 = arith.addf %56, %59 : vector<4x256xf32>
    %61 = arith.negf %60 : vector<4x256xf32>
    %62 = math.exp %61 : vector<4x256xf32>
    %cst_18 = arith.constant 1.000000e+00 : f32
    %63 = vector.broadcast %cst_18 : f32 to vector<4x256xf32>
    %64 = arith.addf %63, %62 : vector<4x256xf32>
    %65 = arith.divf %63, %64 : vector<4x256xf32>
    %66 = vector.extract_strided_slice %65 {offsets = [0, 0], sizes = [4, 64], strides = [1, 1]} : vector<4x256xf32> to vector<4x64xf32>
    %67 = vector.extract_strided_slice %65 {offsets = [0, 64], sizes = [4, 64], strides = [1, 1]} : vector<4x256xf32> to vector<4x64xf32>
    %68 = vector.extract_strided_slice %60 {offsets = [0, 128], sizes = [4, 64], strides = [1, 1]} : vector<4x256xf32> to vector<4x64xf32>
    %69 = math.tanh %68 : vector<4x64xf32>
    %70 = vector.extract_strided_slice %65 {offsets = [0, 192], sizes = [4, 64], strides = [1, 1]} : vector<4x256xf32> to vector<4x64xf32>
    %71 = arith.mulf %67, %55 : vector<4x64xf32>
    %72 = arith.mulf %66, %69 : vector<4x64xf32>
    %73 = arith.addf %71, %72 : vector<4x64xf32>
    %74 = math.tanh %73 : vector<4x64xf32>
    %75 = arith.mulf %70, %74 : vector<4x64xf32>
    %76 = arith.index_cast %c2_i32 : i32 to index
    %c0_19 = arith.constant 0 : index
    %c0_20 = arith.constant 0 : index
    %77 = vector.load %arg2[%76, %c0_19, %c0_20] : memref<9x4x64xf32, #tpu.memory_space<vmem>>, vector<1x4x64xf32>
    %78 = vector.shape_cast %77 : vector<1x4x64xf32> to vector<4x64xf32>
    %cst_21 = arith.constant 0.000000e+00 : f32
    %79 = vector.broadcast %cst_21 : f32 to vector<4x64xf32>
    %80 = arith.cmpf one, %78, %79 : vector<4x64xf32>
    %81 = arith.select %80, %75, %54 : vector<4x64xi1>, vector<4x64xf32>
    %82 = arith.select %80, %73, %55 : vector<4x64xi1>, vector<4x64xf32>
    %c3_i32 = arith.constant 3 : i32
    %cst_22 = arith.constant dense<0.000000e+00> : vector<4x256xf32>
    %83 = tpu.matmul %81, %0, %cst_22 {dimension_numbers = #tpu.dot_dimension_numbers<[1], [0], [0], [1], [0, 0, 1, 1], [], []>} : vector<4x64xf32>, vector<64x256xf32>, vector<4x256xf32> -> vector<4x256xf32>
    %84 = arith.index_cast %c3_i32 : i32 to index
    %c0_23 = arith.constant 0 : index
    %c0_24 = arith.constant 0 : index
    %85 = vector.load %arg1[%84, %c0_23, %c0_24] : memref<9x4x256xf32, #tpu.memory_space<vmem>>, vector<1x4x256xf32>
    %86 = vector.shape_cast %85 : vector<1x4x256xf32> to vector<4x256xf32>
    %87 = arith.addf %83, %86 : vector<4x256xf32>
    %88 = arith.negf %87 : vector<4x256xf32>
    %89 = math.exp %88 : vector<4x256xf32>
    %cst_25 = arith.constant 1.000000e+00 : f32
    %90 = vector.broadcast %cst_25 : f32 to vector<4x256xf32>
    %91 = arith.addf %90, %89 : vector<4x256xf32>
    %92 = arith.divf %90, %91 : vector<4x256xf32>
    %93 = vector.extract_strided_slice %92 {offsets = [0, 0], sizes = [4, 64], strides = [1, 1]} : vector<4x256xf32> to vector<4x64xf32>
    %94 = vector.extract_strided_slice %92 {offsets = [0, 64], sizes = [4, 64], strides = [1, 1]} : vector<4x256xf32> to vector<4x64xf32>
    %95 = vector.extract_strided_slice %87 {offsets = [0, 128], sizes = [4, 64], strides = [1, 1]} : vector<4x256xf32> to vector<4x64xf32>
    %96 = math.tanh %95 : vector<4x64xf32>
    %97 = vector.extract_strided_slice %92 {offsets = [0, 192], sizes = [4, 64], strides = [1, 1]} : vector<4x256xf32> to vector<4x64xf32>
    %98 = arith.mulf %94, %82 : vector<4x64xf32>
    %99 = arith.mulf %93, %96 : vector<4x64xf32>
    %100 = arith.addf %98, %99 : vector<4x64xf32>
    %101 = math.tanh %100 : vector<4x64xf32>
    %102 = arith.mulf %97, %101 : vector<4x64xf32>
    %103 = arith.index_cast %c3_i32 : i32 to index
    %c0_26 = arith.constant 0 : index
    %c0_27 = arith.constant 0 : index
    %104 = vector.load %arg2[%103, %c0_26, %c0_27] : memref<9x4x64xf32, #tpu.memory_space<vmem>>, vector<1x4x64xf32>
    %105 = vector.shape_cast %104 : vector<1x4x64xf32> to vector<4x64xf32>
    %cst_28 = arith.constant 0.000000e+00 : f32
    %106 = vector.broadcast %cst_28 : f32 to vector<4x64xf32>
    %107 = arith.cmpf one, %105, %106 : vector<4x64xf32>
    %108 = arith.select %107, %102, %81 : vector<4x64xi1>, vector<4x64xf32>
    %109 = arith.select %107, %100, %82 : vector<4x64xi1>, vector<4x64xf32>
    %c4_i32 = arith.constant 4 : i32
    %cst_29 = arith.constant dense<0.000000e+00> : vector<4x256xf32>
    %110 = tpu.matmul %108, %0, %cst_29 {dimension_numbers = #tpu.dot_dimension_numbers<[1], [0], [0], [1], [0, 0, 1, 1], [], []>} : vector<4x64xf32>, vector<64x256xf32>, vector<4x256xf32> -> vector<4x256xf32>
    %111 = arith.index_cast %c4_i32 : i32 to index
    %c0_30 = arith.constant 0 : index
    %c0_31 = arith.constant 0 : index
    %112 = vector.load %arg1[%111, %c0_30, %c0_31] : memref<9x4x256xf32, #tpu.memory_space<vmem>>, vector<1x4x256xf32>
    %113 = vector.shape_cast %112 : vector<1x4x256xf32> to vector<4x256xf32>
    %114 = arith.addf %110, %113 : vector<4x256xf32>
    %115 = arith.negf %114 : vector<4x256xf32>
    %116 = math.exp %115 : vector<4x256xf32>
    %cst_32 = arith.constant 1.000000e+00 : f32
    %117 = vector.broadcast %cst_32 : f32 to vector<4x256xf32>
    %118 = arith.addf %117, %116 : vector<4x256xf32>
    %119 = arith.divf %117, %118 : vector<4x256xf32>
    %120 = vector.extract_strided_slice %119 {offsets = [0, 0], sizes = [4, 64], strides = [1, 1]} : vector<4x256xf32> to vector<4x64xf32>
    %121 = vector.extract_strided_slice %119 {offsets = [0, 64], sizes = [4, 64], strides = [1, 1]} : vector<4x256xf32> to vector<4x64xf32>
    %122 = vector.extract_strided_slice %114 {offsets = [0, 128], sizes = [4, 64], strides = [1, 1]} : vector<4x256xf32> to vector<4x64xf32>
    %123 = math.tanh %122 : vector<4x64xf32>
    %124 = vector.extract_strided_slice %119 {offsets = [0, 192], sizes = [4, 64], strides = [1, 1]} : vector<4x256xf32> to vector<4x64xf32>
    %125 = arith.mulf %121, %109 : vector<4x64xf32>
    %126 = arith.mulf %120, %123 : vector<4x64xf32>
    %127 = arith.addf %125, %126 : vector<4x64xf32>
    %128 = math.tanh %127 : vector<4x64xf32>
    %129 = arith.mulf %124, %128 : vector<4x64xf32>
    %130 = arith.index_cast %c4_i32 : i32 to index
    %c0_33 = arith.constant 0 : index
    %c0_34 = arith.constant 0 : index
    %131 = vector.load %arg2[%130, %c0_33, %c0_34] : memref<9x4x64xf32, #tpu.memory_space<vmem>>, vector<1x4x64xf32>
    %132 = vector.shape_cast %131 : vector<1x4x64xf32> to vector<4x64xf32>
    %cst_35 = arith.constant 0.000000e+00 : f32
    %133 = vector.broadcast %cst_35 : f32 to vector<4x64xf32>
    %134 = arith.cmpf one, %132, %133 : vector<4x64xf32>
    %135 = arith.select %134, %129, %108 : vector<4x64xi1>, vector<4x64xf32>
    %136 = arith.select %134, %127, %109 : vector<4x64xi1>, vector<4x64xf32>
    %c5_i32 = arith.constant 5 : i32
    %cst_36 = arith.constant dense<0.000000e+00> : vector<4x256xf32>
    %137 = tpu.matmul %135, %0, %cst_36 {dimension_numbers = #tpu.dot_dimension_numbers<[1], [0], [0], [1], [0, 0, 1, 1], [], []>} : vector<4x64xf32>, vector<64x256xf32>, vector<4x256xf32> -> vector<4x256xf32>
    %138 = arith.index_cast %c5_i32 : i32 to index
    %c0_37 = arith.constant 0 : index
    %c0_38 = arith.constant 0 : index
    %139 = vector.load %arg1[%138, %c0_37, %c0_38] : memref<9x4x256xf32, #tpu.memory_space<vmem>>, vector<1x4x256xf32>
    %140 = vector.shape_cast %139 : vector<1x4x256xf32> to vector<4x256xf32>
    %141 = arith.addf %137, %140 : vector<4x256xf32>
    %142 = arith.negf %141 : vector<4x256xf32>
    %143 = math.exp %142 : vector<4x256xf32>
    %cst_39 = arith.constant 1.000000e+00 : f32
    %144 = vector.broadcast %cst_39 : f32 to vector<4x256xf32>
    %145 = arith.addf %144, %143 : vector<4x256xf32>
    %146 = arith.divf %144, %145 : vector<4x256xf32>
    %147 = vector.extract_strided_slice %146 {offsets = [0, 0], sizes = [4, 64], strides = [1, 1]} : vector<4x256xf32> to vector<4x64xf32>
    %148 = vector.extract_strided_slice %146 {offsets = [0, 64], sizes = [4, 64], strides = [1, 1]} : vector<4x256xf32> to vector<4x64xf32>
    %149 = vector.extract_strided_slice %141 {offsets = [0, 128], sizes = [4, 64], strides = [1, 1]} : vector<4x256xf32> to vector<4x64xf32>
    %150 = math.tanh %149 : vector<4x64xf32>
    %151 = vector.extract_strided_slice %146 {offsets = [0, 192], sizes = [4, 64], strides = [1, 1]} : vector<4x256xf32> to vector<4x64xf32>
    %152 = arith.mulf %148, %136 : vector<4x64xf32>
    %153 = arith.mulf %147, %150 : vector<4x64xf32>
    %154 = arith.addf %152, %153 : vector<4x64xf32>
    %155 = math.tanh %154 : vector<4x64xf32>
    %156 = arith.mulf %151, %155 : vector<4x64xf32>
    %157 = arith.index_cast %c5_i32 : i32 to index
    %c0_40 = arith.constant 0 : index
    %c0_41 = arith.constant 0 : index
    %158 = vector.load %arg2[%157, %c0_40, %c0_41] : memref<9x4x64xf32, #tpu.memory_space<vmem>>, vector<1x4x64xf32>
    %159 = vector.shape_cast %158 : vector<1x4x64xf32> to vector<4x64xf32>
    %cst_42 = arith.constant 0.000000e+00 : f32
    %160 = vector.broadcast %cst_42 : f32 to vector<4x64xf32>
    %161 = arith.cmpf one, %159, %160 : vector<4x64xf32>
    %162 = arith.select %161, %156, %135 : vector<4x64xi1>, vector<4x64xf32>
    %163 = arith.select %161, %154, %136 : vector<4x64xi1>, vector<4x64xf32>
    %c6_i32 = arith.constant 6 : i32
    %cst_43 = arith.constant dense<0.000000e+00> : vector<4x256xf32>
    %164 = tpu.matmul %162, %0, %cst_43 {dimension_numbers = #tpu.dot_dimension_numbers<[1], [0], [0], [1], [0, 0, 1, 1], [], []>} : vector<4x64xf32>, vector<64x256xf32>, vector<4x256xf32> -> vector<4x256xf32>
    %165 = arith.index_cast %c6_i32 : i32 to index
    %c0_44 = arith.constant 0 : index
    %c0_45 = arith.constant 0 : index
    %166 = vector.load %arg1[%165, %c0_44, %c0_45] : memref<9x4x256xf32, #tpu.memory_space<vmem>>, vector<1x4x256xf32>
    %167 = vector.shape_cast %166 : vector<1x4x256xf32> to vector<4x256xf32>
    %168 = arith.addf %164, %167 : vector<4x256xf32>
    %169 = arith.negf %168 : vector<4x256xf32>
    %170 = math.exp %169 : vector<4x256xf32>
    %cst_46 = arith.constant 1.000000e+00 : f32
    %171 = vector.broadcast %cst_46 : f32 to vector<4x256xf32>
    %172 = arith.addf %171, %170 : vector<4x256xf32>
    %173 = arith.divf %171, %172 : vector<4x256xf32>
    %174 = vector.extract_strided_slice %173 {offsets = [0, 0], sizes = [4, 64], strides = [1, 1]} : vector<4x256xf32> to vector<4x64xf32>
    %175 = vector.extract_strided_slice %173 {offsets = [0, 64], sizes = [4, 64], strides = [1, 1]} : vector<4x256xf32> to vector<4x64xf32>
    %176 = vector.extract_strided_slice %168 {offsets = [0, 128], sizes = [4, 64], strides = [1, 1]} : vector<4x256xf32> to vector<4x64xf32>
    %177 = math.tanh %176 : vector<4x64xf32>
    %178 = vector.extract_strided_slice %173 {offsets = [0, 192], sizes = [4, 64], strides = [1, 1]} : vector<4x256xf32> to vector<4x64xf32>
    %179 = arith.mulf %175, %163 : vector<4x64xf32>
    %180 = arith.mulf %174, %177 : vector<4x64xf32>
    %181 = arith.addf %179, %180 : vector<4x64xf32>
    %182 = math.tanh %181 : vector<4x64xf32>
    %183 = arith.mulf %178, %182 : vector<4x64xf32>
    %184 = arith.index_cast %c6_i32 : i32 to index
    %c0_47 = arith.constant 0 : index
    %c0_48 = arith.constant 0 : index
    %185 = vector.load %arg2[%184, %c0_47, %c0_48] : memref<9x4x64xf32, #tpu.memory_space<vmem>>, vector<1x4x64xf32>
    %186 = vector.shape_cast %185 : vector<1x4x64xf32> to vector<4x64xf32>
    %cst_49 = arith.constant 0.000000e+00 : f32
    %187 = vector.broadcast %cst_49 : f32 to vector<4x64xf32>
    %188 = arith.cmpf one, %186, %187 : vector<4x64xf32>
    %189 = arith.select %188, %183, %162 : vector<4x64xi1>, vector<4x64xf32>
    %190 = arith.select %188, %181, %163 : vector<4x64xi1>, vector<4x64xf32>
    %c7_i32 = arith.constant 7 : i32
    %cst_50 = arith.constant dense<0.000000e+00> : vector<4x256xf32>
    %191 = tpu.matmul %189, %0, %cst_50 {dimension_numbers = #tpu.dot_dimension_numbers<[1], [0], [0], [1], [0, 0, 1, 1], [], []>} : vector<4x64xf32>, vector<64x256xf32>, vector<4x256xf32> -> vector<4x256xf32>
    %192 = arith.index_cast %c7_i32 : i32 to index
    %c0_51 = arith.constant 0 : index
    %c0_52 = arith.constant 0 : index
    %193 = vector.load %arg1[%192, %c0_51, %c0_52] : memref<9x4x256xf32, #tpu.memory_space<vmem>>, vector<1x4x256xf32>
    %194 = vector.shape_cast %193 : vector<1x4x256xf32> to vector<4x256xf32>
    %195 = arith.addf %191, %194 : vector<4x256xf32>
    %196 = arith.negf %195 : vector<4x256xf32>
    %197 = math.exp %196 : vector<4x256xf32>
    %cst_53 = arith.constant 1.000000e+00 : f32
    %198 = vector.broadcast %cst_53 : f32 to vector<4x256xf32>
    %199 = arith.addf %198, %197 : vector<4x256xf32>
    %200 = arith.divf %198, %199 : vector<4x256xf32>
    %201 = vector.extract_strided_slice %200 {offsets = [0, 0], sizes = [4, 64], strides = [1, 1]} : vector<4x256xf32> to vector<4x64xf32>
    %202 = vector.extract_strided_slice %200 {offsets = [0, 64], sizes = [4, 64], strides = [1, 1]} : vector<4x256xf32> to vector<4x64xf32>
    %203 = vector.extract_strided_slice %195 {offsets = [0, 128], sizes = [4, 64], strides = [1, 1]} : vector<4x256xf32> to vector<4x64xf32>
    %204 = math.tanh %203 : vector<4x64xf32>
    %205 = vector.extract_strided_slice %200 {offsets = [0, 192], sizes = [4, 64], strides = [1, 1]} : vector<4x256xf32> to vector<4x64xf32>
    %206 = arith.mulf %202, %190 : vector<4x64xf32>
    %207 = arith.mulf %201, %204 : vector<4x64xf32>
    %208 = arith.addf %206, %207 : vector<4x64xf32>
    %209 = math.tanh %208 : vector<4x64xf32>
    %210 = arith.mulf %205, %209 : vector<4x64xf32>
    %211 = arith.index_cast %c7_i32 : i32 to index
    %c0_54 = arith.constant 0 : index
    %c0_55 = arith.constant 0 : index
    %212 = vector.load %arg2[%211, %c0_54, %c0_55] : memref<9x4x64xf32, #tpu.memory_space<vmem>>, vector<1x4x64xf32>
    %213 = vector.shape_cast %212 : vector<1x4x64xf32> to vector<4x64xf32>
    %cst_56 = arith.constant 0.000000e+00 : f32
    %214 = vector.broadcast %cst_56 : f32 to vector<4x64xf32>
    %215 = arith.cmpf one, %213, %214 : vector<4x64xf32>
    %216 = arith.select %215, %210, %189 : vector<4x64xi1>, vector<4x64xf32>
    %217 = arith.select %215, %208, %190 : vector<4x64xi1>, vector<4x64xf32>
    %c8_i32 = arith.constant 8 : i32
    %cst_57 = arith.constant dense<0.000000e+00> : vector<4x256xf32>
    %218 = tpu.matmul %216, %0, %cst_57 {dimension_numbers = #tpu.dot_dimension_numbers<[1], [0], [0], [1], [0, 0, 1, 1], [], []>} : vector<4x64xf32>, vector<64x256xf32>, vector<4x256xf32> -> vector<4x256xf32>
    %219 = arith.index_cast %c8_i32 : i32 to index
    %c0_58 = arith.constant 0 : index
    %c0_59 = arith.constant 0 : index
    %220 = vector.load %arg1[%219, %c0_58, %c0_59] : memref<9x4x256xf32, #tpu.memory_space<vmem>>, vector<1x4x256xf32>
    %221 = vector.shape_cast %220 : vector<1x4x256xf32> to vector<4x256xf32>
    %222 = arith.addf %218, %221 : vector<4x256xf32>
    %223 = arith.negf %222 : vector<4x256xf32>
    %224 = math.exp %223 : vector<4x256xf32>
    %cst_60 = arith.constant 1.000000e+00 : f32
    %225 = vector.broadcast %cst_60 : f32 to vector<4x256xf32>
    %226 = arith.addf %225, %224 : vector<4x256xf32>
    %227 = arith.divf %225, %226 : vector<4x256xf32>
    %228 = vector.extract_strided_slice %227 {offsets = [0, 0], sizes = [4, 64], strides = [1, 1]} : vector<4x256xf32> to vector<4x64xf32>
    %229 = vector.extract_strided_slice %227 {offsets = [0, 64], sizes = [4, 64], strides = [1, 1]} : vector<4x256xf32> to vector<4x64xf32>
    %230 = vector.extract_strided_slice %222 {offsets = [0, 128], sizes = [4, 64], strides = [1, 1]} : vector<4x256xf32> to vector<4x64xf32>
    %231 = math.tanh %230 : vector<4x64xf32>
    %232 = vector.extract_strided_slice %227 {offsets = [0, 192], sizes = [4, 64], strides = [1, 1]} : vector<4x256xf32> to vector<4x64xf32>
    %233 = arith.mulf %229, %217 : vector<4x64xf32>
    %234 = arith.mulf %228, %231 : vector<4x64xf32>
    %235 = arith.addf %233, %234 : vector<4x64xf32>
    %236 = math.tanh %235 : vector<4x64xf32>
    %237 = arith.mulf %232, %236 : vector<4x64xf32>
    %238 = arith.index_cast %c8_i32 : i32 to index
    %c0_61 = arith.constant 0 : index
    %c0_62 = arith.constant 0 : index
    %239 = vector.load %arg2[%238, %c0_61, %c0_62] : memref<9x4x64xf32, #tpu.memory_space<vmem>>, vector<1x4x64xf32>
    %240 = vector.shape_cast %239 : vector<1x4x64xf32> to vector<4x64xf32>
    %cst_63 = arith.constant 0.000000e+00 : f32
    %241 = vector.broadcast %cst_63 : f32 to vector<4x64xf32>
    %242 = arith.cmpf one, %240, %241 : vector<4x64xf32>
    %243 = arith.select %242, %237, %216 : vector<4x64xi1>, vector<4x64xf32>
    %244 = arith.select %242, %235, %217 : vector<4x64xi1>, vector<4x64xf32>
    %c9_i32 = arith.constant 9 : i32
    %245 = vector.extract_strided_slice %243 {offsets = [0, 32], sizes = [4, 32], strides = [1, 1]} : vector<4x64xf32> to vector<4x32xf32>
    %c0_64 = arith.constant 0 : index
    %c0_65 = arith.constant 0 : index
    %246 = vector.load %arg4[%c0_64, %c0_65] : memref<4x32xf32, #tpu.memory_space<vmem>>, vector<4x32xf32>
    tpu.vector_store %arg4[%c0_64, %c0_65], %245 {strides = array<i32>} : memref<4x32xf32, #tpu.memory_space<vmem>>, vector<4x32xf32>,
    return
  }
  func.func @transform_0(%arg0: i32) -> (i32, i32, i32) {
    %c0_i32 = arith.constant 0 : i32
    %c0_i32_0 = arith.constant 0 : i32
    %c0_i32_1 = arith.constant 0 : i32
    %c0_i32_2 = arith.constant 0 : i32
    return %c0_i32, %c0_i32_0, %c0_i32_1 : i32, i32, i32
  }
  func.func @transform_1(%arg0: i32) -> (i32, i32, i32) {
    %c0_i32 = arith.constant 0 : i32
    %c0_i32_0 = arith.constant 0 : i32
    %c0_i32_1 = arith.constant 0 : i32
    %c0_i32_2 = arith.constant 0 : i32
    return %c0_i32, %c0_i32_0, %c0_i32_1 : i32, i32, i32
  }
  func.func @transform_2(%arg0: i32) -> (i32, i32) {
    %c0_i32 = arith.constant 0 : i32
    %c0_i32_0 = arith.constant 0 : i32
    %c0_i32_1 = arith.constant 0 : i32
    return %c0_i32, %c0_i32_0 : i32, i32
  }
  func.func @transform_3(%arg0: i32) -> (i32, i32) {
    %c0_i32 = arith.constant 0 : i32
    %c0_i32_0 = arith.constant 0 : i32
    %c0_i32_1 = arith.constant 0 : i32
    return %c0_i32, %c0_i32_0 : i32, i32
  }
}

</mosaic_0001>

<llo_original>
// kernel: tpu_custom_call.1
$region0: #{tpu_custom_call.1}
  #allocation0 [shape = 'u32[]', space=smem, size = 0x4, offset = 0x4, fixed_abs, tag = 'smem constant byte address 0x4 - core index']
  #allocation1 [shape = 'u32[72,128]{1,0:T(1,128)}', space=vmem, size = 0x9000, scoped, tag = 'internal scratch']
  %s0 = inlined_call_operand.hbm [shape: f32[9,4,256], index: 0, kind: input, shape index: {}]
  %s1 = inlined_call_operand.hbm [shape: f32[9,4,64], index: 1, kind: input, shape index: {}]
  %s2 = inlined_call_operand.hbm [shape: f32[64,256], index: 2, kind: input, shape index: {}]
  %s3 = inlined_call_operand.hbm [shape: f32[4,32], index: 3, kind: output, shape index: {}]
  %s4 = sld [smem:[#allocation0]]
  $region34: #{tpu_custom_call.1} parent=0
    _
  %s6 = ssub.s32 1, %s4
  %s7 = scalar_select 0, %s6, %s4
  $region1: #{tpu_custom_call.1} parent=0
    #allocation2 [shape = 'u8[36864]{0}', space=vmem, size = 0x9000, scoped, tag = 'input window, operand 0, single buffered']
    #allocation3 [shape = 's32[1]{0}', space=sflag, size = 0x4, scoped, tag = 'scoped memory for tpu_custom_call.1']
    #allocation4 [shape = 's32[1]{0}', space=sflag, size = 0x4, scoped, tag = 'scoped memory for tpu_custom_call.1']
    #allocation5 [shape = 'u8[18432]{0}', space=vmem, size = 0x4800, scoped, tag = 'input window, operand 1, single buffered']
    #allocation6 [shape = 's32[1]{0}', space=sflag, size = 0x4, scoped, tag = 'scoped memory for tpu_custom_call.1']
    #allocation7 [shape = 'u8[65536]{0}', space=vmem, size = 0x10000, scoped, tag = 'input window, operand 2, single buffered']
    #allocation8 [shape = 'u8[2048]{0}', space=vmem, size = 0x800, scoped, tag = 'output window, operand 0, single buffered']
    %8 = vsyncpa [#allocation3], 0
    %9 = vsyncpa [#allocation6], 0
    %10 = vsyncpa [#allocation4], 0
    // Predicated region
    $region2: #{tpu_custom_call.1} parent=1 // pred_check
      _
    $region3: #{tpu_custom_call.1} parent=1 // pred_check_branch
      %12 = sbr.rel (0) target = $region5
    $region4: #{tpu_custom_call.1} parent=1 // pred_region
      %14 = vsyncadd [#allocation3], 0
      %s15 = sshll.u32 %s0, 4
      %s16 = int_to_ptr.hbm [resolvable:$true] %s15
      %s17 = sshll.u32 [#allocation2], 4
      %s18 = int_to_ptr.vmem [resolvable:$true] %s17
      %23 = dma.hbm_to_vmem [thread:$0]  %s16, 1152, %s18, [#allocation3], 128, 128, 8
    $region5: #{tpu_custom_call.1} parent=1 // pred_fallthru
      _
    // Predicated region
    $region6: #{tpu_custom_call.1} parent=1 // pred_check
      _
    $region7: #{tpu_custom_call.1} parent=1 // pred_check_branch
      %25 = sbr.rel (0) target = $region9
    $region8: #{tpu_custom_call.1} parent=1 // pred_region
      %27 = vsyncadd [#allocation6], 0
      %s28 = sshll.u32 %s1, 4
      %s29 = int_to_ptr.hbm [resolvable:$true] %s28
      %s30 = sshll.u32 [#allocation5], 4
      %s31 = int_to_ptr.vmem [resolvable:$true] %s30
      %36 = dma.hbm_to_vmem [thread:$0]  %s29, 576, %s31, [#allocation6], 64, 64, 4
    $region9: #{tpu_custom_call.1} parent=1 // pred_fallthru
      _
    // Predicated region
    $region10: #{tpu_custom_call.1} parent=1 // pred_check
      _
    $region11: #{tpu_custom_call.1} parent=1 // pred_check_branch
      %38 = sbr.rel (0) target = $region13
    $region12: #{tpu_custom_call.1} parent=1 // pred_region
      %40 = vsyncadd [#allocation6], 0
      %s41 = sshll.u32 %s2, 4
      %s42 = int_to_ptr.hbm [resolvable:$true] %s41
      %s43 = sshll.u32 [#allocation7], 4
      %s44 = int_to_ptr.vmem [resolvable:$true] %s43
      %49 = dma.hbm_to_vmem [thread:$0]  %s42, 2048, %s44, [#allocation6], 256, 256, 16
    $region13: #{tpu_custom_call.1} parent=1 // pred_fallthru
      _
    // Predicated region
    $region14: #{tpu_custom_call.1} parent=1 // pred_check
      _
    $region15: #{tpu_custom_call.1} parent=1 // pred_check_branch
      %51 = sbr.rel (0) target = $region17
    $region16: #{tpu_custom_call.1} parent=1 // pred_region
      %53 = dma.done [#allocation3], 1152
    $region17: #{tpu_custom_call.1} parent=1 // pred_fallthru
      _
    // Predicated region
    $region18: #{tpu_custom_call.1} parent=1 // pred_check
      _
    $region19: #{tpu_custom_call.1} parent=1 // pred_check_branch
      %55 = sbr.rel (0) target = $region21
    $region20: #{tpu_custom_call.1} parent=1 // pred_region
      %57 = dma.done [#allocation6], 576
    $region21: #{tpu_custom_call.1} parent=1 // pred_fallthru
      _
    // Predicated region
    $region22: #{tpu_custom_call.1} parent=1 // pred_check
      _
    $region23: #{tpu_custom_call.1} parent=1 // pred_check_branch
      %59 = sbr.rel (0) target = $region25
    $region24: #{tpu_custom_call.1} parent=1 // pred_region
      %61 = dma.done [#allocation6], 2048
    $region25: #{tpu_custom_call.1} parent=1 // pred_fallthru
      _
    %v62 = vld [vmem:[#allocation7] sm:$0xff]
    %v63 = vld [vmem:[#allocation7 + $0x8] sm:$0xff]
    %v64 = vld [vmem:[#allocation7 + $0x10] sm:$0xff]
    %v65 = vld [vmem:[#allocation7 + $0x18] sm:$0xff]
    %v66 = vld [vmem:[#allocation7 + $0x20] sm:$0xff]
    %v67 = vld [vmem:[#allocation7 + $0x28] sm:$0xff]
    %v68 = vld [vmem:[#allocation7 + $0x30] sm:$0xff]
    %v69 = vld [vmem:[#allocation7 + $0x38] sm:$0xff]
    %v70 = vld [vmem:[#allocation7 + $0x40] sm:$0xff]
    %v71 = vld [vmem:[#allocation7 + $0x48] sm:$0xff]
    %v72 = vld [vmem:[#allocation7 + $0x50] sm:$0xff]
    %v73 = vld [vmem:[#allocation7 + $0x58] sm:$0xff]
    %v74 = vld [vmem:[#allocation7 + $0x60] sm:$0xff]
    %v75 = vld [vmem:[#allocation7 + $0x68] sm:$0xff]
    %v76 = vld [vmem:[#allocation7 + $0x70] sm:$0xff]
    %v77 = vld [vmem:[#allocation7 + $0x78] sm:$0xff]
    %v78 = vld [vmem:[#allocation2] sm:$0xff]
    %80 = vst [vmem:[#allocation1] ss:$2 sm:$0xff] %v78
    %v81 = vld.sshfl [vmem:[#allocation1] sm:$0xff pattern:$0x75316420]
    %v82 = vld.sshfl [vmem:[#allocation1 + $0x8] sm:$0xff pattern:$0x75316420]
    %vm85 = vcmask 523264
    %v87 = vsel %vm85, 0.0, 0
    %89 = vmatpush.msra.mxu0 0.0
    %90 = vmatpush.msra.mxu0 0.0
    %91 = vmatpush.msra.mxu0 0.0
    %92 = vmatpush.msra.mxu0 0.0
    %93 = vmatpush.msra.mxu0 0.0
    %94 = vmatpush.msra.mxu0 0.0
    %95 = vmatpush.msra.mxu0 0.0
    %96 = vmatpush.msra.mxu0 0.0
    %97 = vmatpush.msra.mxu0 %v76
    %98 = vmatpush.msra.mxu0 %v74
    %99 = vmatpush.msra.mxu0 %v72
    %100 = vmatpush.msra.mxu0 %v70
    %101 = vmatpush.msra.mxu0 %v68
    %102 = vmatpush.msra.mxu0 %v66
    %103 = vmatpush.msra.mxu0 %v64
    %104 = vmatpush.msra.mxu0 %v62
    %105 = vmatmul.f32.gmra.mxu0 %v87
    %v106 = vpop.f32.mrf.mxu0
    %v107 = vadd.f32 %v81, %v106
    %108 = vdwg.mxu0
    %109 = vmatpush.msra.mxu0 0.0
    %110 = vmatpush.msra.mxu0 0.0
    %111 = vmatpush.msra.mxu0 0.0
    %112 = vmatpush.msra.mxu0 0.0
    %113 = vmatpush.msra.mxu0 0.0
    %114 = vmatpush.msra.mxu0 0.0
    %115 = vmatpush.msra.mxu0 0.0
    %116 = vmatpush.msra.mxu0 0.0
    %117 = vmatpush.msra.mxu0 %v77
    %118 = vmatpush.msra.mxu0 %v75
    %119 = vmatpush.msra.mxu0 %v73
    %120 = vmatpush.msra.mxu0 %v71
    %121 = vmatpush.msra.mxu0 %v69
    %122 = vmatpush.msra.mxu0 %v67
    %123 = vmatpush.msra.mxu0 %v65
    %124 = vmatpush.msra.mxu0 %v63
    %125 = vmatmul.f32.gmra.mxu0 %v87
    %v126 = vpop.f32.mrf.mxu0
    %v127 = vadd.f32 %v82, %v126
    %128 = vdwg.mxu0
    %v129 = vxor.u32 %v107, 2147483648
    %v130 = vxor.u32 %v127, 2147483648
    %v131 = vmul.f32 %v129, 1.442695
    %v132 = vpow.pop %v131
    %v133 = vmul.f32 %v130, 1.442695
    %v134 = vpow.pop %v133
    %v135 = vadd.f32 %v132, 1.0
    %v136 = vadd.f32 %v134, 1.0
    %v137 = vrcp.pop %v135
    %v138 = vmul.f32 %v135, %v137
    %v139 = vsub.f32 1.0, %v138
    %v140 = vmul.f32 %v137, %v139
    %v141 = vadd.f32 %v137, %v140
    %vm142 = vweird.f32 %v135
    %vm143 = vweird.f32 %v137
    %vm144 = vmor %vm142, %vm143
    %v145 = vsel %vm144, %v137, %v141
    %v146 = vand.u32 2147483647, %v135
    %vm147 = vcmp.eq.f32.partialorder %v146, 8.507059e+37
    %v148 = vand.u32 %v135, 2147483648
    %v149 = vor.u32 1.1754944e-38, %v148
    %v150 = vsel %vm147, %v149, %v145
    %v151 = vmul.f32 1.0, %v150
    %v152 = vrcp.pop %v136
    %v153 = vmul.f32 %v136, %v152
    %v154 = vsub.f32 1.0, %v153
    %v155 = vmul.f32 %v152, %v154
    %v156 = vadd.f32 %v152, %v155
    %vm157 = vweird.f32 %v136
    %vm158 = vweird.f32 %v152
    %vm159 = vmor %vm157, %vm158
    %v160 = vsel %vm159, %v152, %v156
    %v161 = vand.u32 2147483647, %v136
    %vm162 = vcmp.eq.f32.partialorder %v161, 8.507059e+37
    %v163 = vand.u32 %v136, 2147483648
    %v164 = vor.u32 1.1754944e-38, %v163
    %v165 = vsel %vm162, %v164, %v160
    %v166 = vmul.f32 1.0, %v165
    %v167 = vtanh.pop %v127
    %v168 = vmul.f32 %v151, 0.0
    %v169 = vmul.f32 %v151, %v167
    %171 = vrot.lane.b32.xlu0 %v169, 64
    %v172 = vpop.permute.xlu0 %171
    %v174 = vadd.f32 %v168, %v172
    %v175 = vtanh.pop %v174
    %v176 = vmul.f32 %v166, %v175
    %v177 = vld [vmem:[#allocation5] sm:$0xf]
    %vm178 = vcmp.ne.f32.partialorder %v177, 0.0
    %180 = vrot.lane.b32.xlu0 %v176, 64
    %v181 = vpop.permute.xlu0 %180
    %v183 = vsel %vm178, %v181, 0.0
    %185 = vrot.lane.b32.xlu0 %v174, 64
    %v186 = vpop.permute.xlu0 %185
    %v188 = vsel %vm178, %v186, 0.0
    %s189 = scalar_lea.vmem [#allocation2], 8
    %v190 = vld [vmem:[%s189] sm:$0xff]
    %192 = vst [vmem:[#allocation1] ss:$2 sm:$0xff] %v190
    %v193 = vld.sshfl [vmem:[#allocation1] sm:$0xff pattern:$0x75316420]
    %v194 = vld.sshfl [vmem:[#allocation1 + $0x8] sm:$0xff pattern:$0x75316420]
    %v198 = vsel %vm85, %v183, 0
    %200 = vmatpush.msra.mxu0 0.0
    %201 = vmatpush.msra.mxu0 0.0
    %202 = vmatpush.msra.mxu0 0.0
    %203 = vmatpush.msra.mxu0 0.0
    %204 = vmatpush.msra.mxu0 0.0
    %205 = vmatpush.msra.mxu0 0.0
    %206 = vmatpush.msra.mxu0 0.0
    %207 = vmatpush.msra.mxu0 0.0
    %208 = vmatpush.msra.mxu0 %v76
    %209 = vmatpush.msra.mxu0 %v74
    %210 = vmatpush.msra.mxu0 %v72
    %211 = vmatpush.msra.mxu0 %v70
    %212 = vmatpush.msra.mxu0 %v68
    %213 = vmatpush.msra.mxu0 %v66
    %214 = vmatpush.msra.mxu0 %v64
    %215 = vmatpush.msra.mxu0 %v62
    %216 = vmatmul.f32.gmra.mxu0 %v198
    %v217 = vpop.f32.mrf.mxu0
    %v218 = vadd.f32 %v193, %v217
    %219 = vdwg.mxu0
    %220 = vmatpush.msra.mxu0 0.0
    %221 = vmatpush.msra.mxu0 0.0
    %222 = vmatpush.msra.mxu0 0.0
    %223 = vmatpush.msra.mxu0 0.0
    %224 = vmatpush.msra.mxu0 0.0
    %225 = vmatpush.msra.mxu0 0.0
    %226 = vmatpush.msra.mxu0 0.0
    %227 = vmatpush.msra.mxu0 0.0
    %228 = vmatpush.msra.mxu0 %v77
    %229 = vmatpush.msra.mxu0 %v75
    %230 = vmatpush.msra.mxu0 %v73
    %231 = vmatpush.msra.mxu0 %v71
    %232 = vmatpush.msra.mxu0 %v69
    %233 = vmatpush.msra.mxu0 %v67
    %234 = vmatpush.msra.mxu0 %v65
    %235 = vmatpush.msra.mxu0 %v63
    %236 = vmatmul.f32.gmra.mxu0 %v198
    %v237 = vpop.f32.mrf.mxu0
    %v238 = vadd.f32 %v194, %v237
    %239 = vdwg.mxu0
    %v240 = vxor.u32 %v218, 2147483648
    %v241 = vxor.u32 %v238, 2147483648
    %v242 = vmul.f32 %v240, 1.442695
    %v243 = vpow.pop %v242
    %v244 = vmul.f32 %v241, 1.442695
    %v245 = vpow.pop %v244
    %v246 = vadd.f32 %v243, 1.0
    %v247 = vadd.f32 %v245, 1.0
    %v248 = vrcp.pop %v246
    %v249 = vmul.f32 %v246, %v248
    %v250 = vsub.f32 1.0, %v249
    %v251 = vmul.f32 %v248, %v250
    %v252 = vadd.f32 %v248, %v251
    %vm253 = vweird.f32 %v246
    %vm254 = vweird.f32 %v248
    %vm255 = vmor %vm253, %vm254
    %v256 = vsel %vm255, %v248, %v252
    %v257 = vand.u32 2147483647, %v246
    %vm258 = vcmp.eq.f32.partialorder %v257, 8.507059e+37
    %v259 = vand.u32 %v246, 2147483648
    %v260 = vor.u32 1.1754944e-38, %v259
    %v261 = vsel %vm258, %v260, %v256
    %v262 = vmul.f32 1.0, %v261
    %v263 = vrcp.pop %v247
    %v264 = vmul.f32 %v247, %v263
    %v265 = vsub.f32 1.0, %v264
    %v266 = vmul.f32 %v263, %v265
    %v267 = vadd.f32 %v263, %v266
    %vm268 = vweird.f32 %v247
    %vm269 = vweird.f32 %v263
    %vm270 = vmor %vm268, %vm269
    %v271 = vsel %vm270, %v263, %v267
    %v272 = vand.u32 2147483647, %v247
    %vm273 = vcmp.eq.f32.partialorder %v272, 8.507059e+37
    %v274 = vand.u32 %v247, 2147483648
    %v275 = vor.u32 1.1754944e-38, %v274
    %v276 = vsel %vm273, %v275, %v271
    %v277 = vmul.f32 1.0, %v276
    %v278 = vtanh.pop %v238
    %280 = vrot.lane.b32.xlu0 %v188, 64
    %v281 = vpop.permute.xlu0 %280
    %v283 = vmul.f32 %v262, %v281
    %v284 = vmul.f32 %v262, %v278
    %286 = vrot.lane.b32.xlu0 %v284, 64
    %v287 = vpop.permute.xlu0 %286
    %v289 = vadd.f32 %v283, %v287
    %v290 = vtanh.pop %v289
    %v291 = vmul.f32 %v277, %v290
    %s292 = scalar_lea.vmem [#allocation5], 4
    %v293 = vld [vmem:[%s292] sm:$0xf]
    %vm294 = vcmp.ne.f32.partialorder %v293, 0.0
    %296 = vrot.lane.b32.xlu0 %v291, 64
    %v297 = vpop.permute.xlu0 %296
    %v299 = vsel %vm294, %v297, %v183
    %301 = vrot.lane.b32.xlu0 %v289, 64
    %v302 = vpop.permute.xlu0 %301
    %v304 = vsel %vm294, %v302, %v188
    %s305 = scalar_lea.vmem [#allocation2], 16
    %v306 = vld [vmem:[%s305] sm:$0xff]
    %308 = vst [vmem:[#allocation1] ss:$2 sm:$0xff] %v306
    %v309 = vld.sshfl [vmem:[#allocation1] sm:$0xff pattern:$0x75316420]
    %v310 = vld.sshfl [vmem:[#allocation1 + $0x8] sm:$0xff pattern:$0x75316420]
    %v314 = vsel %vm85, %v299, 0
    %316 = vmatpush.msra.mxu0 0.0
    %317 = vmatpush.msra.mxu0 0.0
    %318 = vmatpush.msra.mxu0 0.0
    %319 = vmatpush.msra.mxu0 0.0
    %320 = vmatpush.msra.mxu0 0.0
    %321 = vmatpush.msra.mxu0 0.0
    %322 = vmatpush.msra.mxu0 0.0
    %323 = vmatpush.msra.mxu0 0.0
    %324 = vmatpush.msra.mxu0 %v76
    %325 = vmatpush.msra.mxu0 %v74
    %326 = vmatpush.msra.mxu0 %v72
    %327 = vmatpush.msra.mxu0 %v70
    %328 = vmatpush.msra.mxu0 %v68
    %329 = vmatpush.msra.mxu0 %v66
    %330 = vmatpush.msra.mxu0 %v64
    %331 = vmatpush.msra.mxu0 %v62
    %332 = vmatmul.f32.gmra.mxu0 %v314
    %v333 = vpop.f32.mrf.mxu0
    %v334 = vadd.f32 %v309, %v333
    %335 = vdwg.mxu0
    %336 = vmatpush.msra.mxu0 0.0
    %337 = vmatpush.msra.mxu0 0.0
    %338 = vmatpush.msra.mxu0 0.0
    %339 = vmatpush.msra.mxu0 0.0
    %340 = vmatpush.msra.mxu0 0.0
    %341 = vmatpush.msra.mxu0 0.0
    %342 = vmatpush.msra.mxu0 0.0
    %343 = vmatpush.msra.mxu0 0.0
    %344 = vmatpush.msra.mxu0 %v77
    %345 = vmatpush.msra.mxu0 %v75
    %346 = vmatpush.msra.mxu0 %v73
    %347 = vmatpush.msra.mxu0 %v71
    %348 = vmatpush.msra.mxu0 %v69
    %349 = vmatpush.msra.mxu0 %v67
    %350 = vmatpush.msra.mxu0 %v65
    %351 = vmatpush.msra.mxu0 %v63
    %352 = vmatmul.f32.gmra.mxu0 %v314
    %v353 = vpop.f32.mrf.mxu0
    %v354 = vadd.f32 %v310, %v353
    %355 = vdwg.mxu0
    %v356 = vxor.u32 %v334, 2147483648
    %v357 = vxor.u32 %v354, 2147483648
    %v358 = vmul.f32 %v356, 1.442695
    %v359 = vpow.pop %v358
    %v360 = vmul.f32 %v357, 1.442695
    %v361 = vpow.pop %v360
    %v362 = vadd.f32 %v359, 1.0
    %v363 = vadd.f32 %v361, 1.0
    %v364 = vrcp.pop %v362
    %v365 = vmul.f32 %v362, %v364
    %v366 = vsub.f32 1.0, %v365
    %v367 = vmul.f32 %v364, %v366
    %v368 = vadd.f32 %v364, %v367
    %vm369 = vweird.f32 %v362
    %vm370 = vweird.f32 %v364
    %vm371 = vmor %vm369, %vm370
    %v372 = vsel %vm371, %v364, %v368
    %v373 = vand.u32 2147483647, %v362
    %vm374 = vcmp.eq.f32.partialorder %v373, 8.507059e+37
    %v375 = vand.u32 %v362, 2147483648
    %v376 = vor.u32 1.1754944e-38, %v375
    %v377 = vsel %vm374, %v376, %v372
    %v378 = vmul.f32 1.0, %v377
    %v379 = vrcp.pop %v363
    %v380 = vmul.f32 %v363, %v379
    %v381 = vsub.f32 1.0, %v380
    %v382 = vmul.f32 %v379, %v381
    %v383 = vadd.f32 %v379, %v382
    %vm384 = vweird.f32 %v363
    %vm385 = vweird.f32 %v379
    %vm386 = vmor %vm384, %vm385
    %v387 = vsel %vm386, %v379, %v383
    %v388 = vand.u32 2147483647, %v363
    %vm389 = vcmp.eq.f32.partialorder %v388, 8.507059e+37
    %v390 = vand.u32 %v363, 2147483648
    %v391 = vor.u32 1.1754944e-38, %v390
    %v392 = vsel %vm389, %v391, %v387
    %v393 = vmul.f32 1.0, %v392
    %v394 = vtanh.pop %v354
    %396 = vrot.lane.b32.xlu0 %v304, 64
    %v397 = vpop.permute.xlu0 %396
    %v399 = vmul.f32 %v378, %v397
    %v400 = vmul.f32 %v378, %v394
    %402 = vrot.lane.b32.xlu0 %v400, 64
    %v403 = vpop.permute.xlu0 %402
    %v405 = vadd.f32 %v399, %v403
    %v406 = vtanh.pop %v405
    %v407 = vmul.f32 %v393, %v406
    %s408 = scalar_lea.vmem [#allocation5], 8
    %v409 = vld [vmem:[%s408] sm:$0xf]
    %vm410 = vcmp.ne.f32.partialorder %v409, 0.0
    %412 = vrot.lane.b32.xlu0 %v407, 64
    %v413 = vpop.permute.xlu0 %412
    %v415 = vsel %vm410, %v413, %v299
    %417 = vrot.lane.b32.xlu0 %v405, 64
    %v418 = vpop.permute.xlu0 %417
    %v420 = vsel %vm410, %v418, %v304
    %s421 = scalar_lea.vmem [#allocation2], 24
    %v422 = vld [vmem:[%s421] sm:$0xff]
    %424 = vst [vmem:[#allocation1] ss:$2 sm:$0xff] %v422
    %v425 = vld.sshfl [vmem:[#allocation1] sm:$0xff pattern:$0x75316420]
    %v426 = vld.sshfl [vmem:[#allocation1 + $0x8] sm:$0xff pattern:$0x75316420]
    %v430 = vsel %vm85, %v415, 0
    %432 = vmatpush.msra.mxu0 0.0
    %433 = vmatpush.msra.mxu0 0.0
    %434 = vmatpush.msra.mxu0 0.0
    %435 = vmatpush.msra.mxu0 0.0
    %436 = vmatpush.msra.mxu0 0.0
    %437 = vmatpush.msra.mxu0 0.0
    %438 = vmatpush.msra.mxu0 0.0
    %439 = vmatpush.msra.mxu0 0.0
    %440 = vmatpush.msra.mxu0 %v76
    %441 = vmatpush.msra.mxu0 %v74
    %442 = vmatpush.msra.mxu0 %v72
    %443 = vmatpush.msra.mxu0 %v70
    %444 = vmatpush.msra.mxu0 %v68
    %445 = vmatpush.msra.mxu0 %v66
    %446 = vmatpush.msra.mxu0 %v64
    %447 = vmatpush.msra.mxu0 %v62
    %448 = vmatmul.f32.gmra.mxu0 %v430
    %v449 = vpop.f32.mrf.mxu0
    %v450 = vadd.f32 %v425, %v449
    %451 = vdwg.mxu0
    %452 = vmatpush.msra.mxu0 0.0
    %453 = vmatpush.msra.mxu0 0.0
    %454 = vmatpush.msra.mxu0 0.0
    %455 = vmatpush.msra.mxu0 0.0
    %456 = vmatpush.msra.mxu0 0.0
    %457 = vmatpush.msra.mxu0 0.0
    %458 = vmatpush.msra.mxu0 0.0
    %459 = vmatpush.msra.mxu0 0.0
    %460 = vmatpush.msra.mxu0 %v77
    %461 = vmatpush.msra.mxu0 %v75
    %462 = vmatpush.msra.mxu0 %v73
    %463 = vmatpush.msra.mxu0 %v71
    %464 = vmatpush.msra.mxu0 %v69
    %465 = vmatpush.msra.mxu0 %v67
    %466 = vmatpush.msra.mxu0 %v65
    %467 = vmatpush.msra.mxu0 %v63
    %468 = vmatmul.f32.gmra.mxu0 %v430
    %v469 = vpop.f32.mrf.mxu0
    %v470 = vadd.f32 %v426, %v469
    %471 = vdwg.mxu0
    %v472 = vxor.u32 %v450, 2147483648
    %v473 = vxor.u32 %v470, 2147483648
    %v474 = vmul.f32 %v472, 1.442695
    %v475 = vpow.pop %v474
    %v476 = vmul.f32 %v473, 1.442695
    %v477 = vpow.pop %v476
    %v478 = vadd.f32 %v475, 1.0
    %v479 = vadd.f32 %v477, 1.0
    %v480 = vrcp.pop %v478
    %v481 = vmul.f32 %v478, %v480
    %v482 = vsub.f32 1.0, %v481
    %v483 = vmul.f32 %v480, %v482
    %v484 = vadd.f32 %v480, %v483
    %vm485 = vweird.f32 %v478
    %vm486 = vweird.f32 %v480
    %vm487 = vmor %vm485, %vm486
    %v488 = vsel %vm487, %v480, %v484
    %v489 = vand.u32 2147483647, %v478
    %vm490 = vcmp.eq.f32.partialorder %v489, 8.507059e+37
    %v491 = vand.u32 %v478, 2147483648
    %v492 = vor.u32 1.1754944e-38, %v491
    %v493 = vsel %vm490, %v492, %v488
    %v494 = vmul.f32 1.0, %v493
    %v495 = vrcp.pop %v479
    %v496 = vmul.f32 %v479, %v495
    %v497 = vsub.f32 1.0, %v496
    %v498 = vmul.f32 %v495, %v497
    %v499 = vadd.f32 %v495, %v498
    %vm500 = vweird.f32 %v479
    %vm501 = vweird.f32 %v495
    %vm502 = vmor %vm500, %vm501
    %v503 = vsel %vm502, %v495, %v499
    %v504 = vand.u32 2147483647, %v479
    %vm505 = vcmp.eq.f32.partialorder %v504, 8.507059e+37
    %v506 = vand.u32 %v479, 2147483648
    %v507 = vor.u32 1.1754944e-38, %v506
    %v508 = vsel %vm505, %v507, %v503
    %v509 = vmul.f32 1.0, %v508
    %v510 = vtanh.pop %v470
    %512 = vrot.lane.b32.xlu0 %v420, 64
    %v513 = vpop.permute.xlu0 %512
    %v515 = vmul.f32 %v494, %v513
    %v516 = vmul.f32 %v494, %v510
    %518 = vrot.lane.b32.xlu0 %v516, 64
    %v519 = vpop.permute.xlu0 %518
    %v521 = vadd.f32 %v515, %v519
    %v522 = vtanh.pop %v521
    %v523 = vmul.f32 %v509, %v522
    %s524 = scalar_lea.vmem [#allocation5], 12
    %v525 = vld [vmem:[%s524] sm:$0xf]
    %vm526 = vcmp.ne.f32.partialorder %v525, 0.0
    %528 = vrot.lane.b32.xlu0 %v523, 64
    %v529 = vpop.permute.xlu0 %528
    %v531 = vsel %vm526, %v529, %v415
    %533 = vrot.lane.b32.xlu0 %v521, 64
    %v534 = vpop.permute.xlu0 %533
    %v536 = vsel %vm526, %v534, %v420
    %s537 = scalar_lea.vmem [#allocation2], 32
    %v538 = vld [vmem:[%s537] sm:$0xff]
    %540 = vst [vmem:[#allocation1] ss:$2 sm:$0xff] %v538
    %v541 = vld.sshfl [vmem:[#allocation1] sm:$0xff pattern:$0x75316420]
    %v542 = vld.sshfl [vmem:[#allocation1 + $0x8] sm:$0xff pattern:$0x75316420]
    %v546 = vsel %vm85, %v531, 0
    %548 = vmatpush.msra.mxu0 0.0
    %549 = vmatpush.msra.mxu0 0.0
    %550 = vmatpush.msra.mxu0 0.0
    %551 = vmatpush.msra.mxu0 0.0
    %552 = vmatpush.msra.mxu0 0.0
    %553 = vmatpush.msra.mxu0 0.0
    %554 = vmatpush.msra.mxu0 0.0
    %555 = vmatpush.msra.mxu0 0.0
    %556 = vmatpush.msra.mxu0 %v76
    %557 = vmatpush.msra.mxu0 %v74
    %558 = vmatpush.msra.mxu0 %v72
    %559 = vmatpush.msra.mxu0 %v70
    %560 = vmatpush.msra.mxu0 %v68
    %561 = vmatpush.msra.mxu0 %v66
    %562 = vmatpush.msra.mxu0 %v64
    %563 = vmatpush.msra.mxu0 %v62
    %564 = vmatmul.f32.gmra.mxu0 %v546
    %v565 = vpop.f32.mrf.mxu0
    %v566 = vadd.f32 %v541, %v565
    %567 = vdwg.mxu0
    %568 = vmatpush.msra.mxu0 0.0
    %569 = vmatpush.msra.mxu0 0.0
    %570 = vmatpush.msra.mxu0 0.0
    %571 = vmatpush.msra.mxu0 0.0
    %572 = vmatpush.msra.mxu0 0.0
    %573 = vmatpush.msra.mxu0 0.0
    %574 = vmatpush.msra.mxu0 0.0
    %575 = vmatpush.msra.mxu0 0.0
    %576 = vmatpush.msra.mxu0 %v77
    %577 = vmatpush.msra.mxu0 %v75
    %578 = vmatpush.msra.mxu0 %v73
    %579 = vmatpush.msra.mxu0 %v71
    %580 = vmatpush.msra.mxu0 %v69
    %581 = vmatpush.msra.mxu0 %v67
    %582 = vmatpush.msra.mxu0 %v65
    %583 = vmatpush.msra.mxu0 %v63
    %584 = vmatmul.f32.gmra.mxu0 %v546
    %v585 = vpop.f32.mrf.mxu0
    %v586 = vadd.f32 %v542, %v585
    %587 = vdwg.mxu0
    %v588 = vxor.u32 %v566, 2147483648
    %v589 = vxor.u32 %v586, 2147483648
    %v590 = vmul.f32 %v588, 1.442695
    %v591 = vpow.pop %v590
    %v592 = vmul.f32 %v589, 1.442695
    %v593 = vpow.pop %v592
    %v594 = vadd.f32 %v591, 1.0
    %v595 = vadd.f32 %v593, 1.0
    %v596 = vrcp.pop %v594
    %v597 = vmul.f32 %v594, %v596
    %v598 = vsub.f32 1.0, %v597
    %v599 = vmul.f32 %v596, %v598
    %v600 = vadd.f32 %v596, %v599
    %vm601 = vweird.f32 %v594
    %vm602 = vweird.f32 %v596
    %vm603 = vmor %vm601, %vm602
    %v604 = vsel %vm603, %v596, %v600
    %v605 = vand.u32 2147483647, %v594
    %vm606 = vcmp.eq.f32.partialorder %v605, 8.507059e+37
    %v607 = vand.u32 %v594, 2147483648
    %v608 = vor.u32 1.1754944e-38, %v607
    %v609 = vsel %vm606, %v608, %v604
    %v610 = vmul.f32 1.0, %v609
    %v611 = vrcp.pop %v595
    %v612 = vmul.f32 %v595, %v611
    %v613 = vsub.f32 1.0, %v612
    %v614 = vmul.f32 %v611, %v613
    %v615 = vadd.f32 %v611, %v614
    %vm616 = vweird.f32 %v595
    %vm617 = vweird.f32 %v611
    %vm618 = vmor %vm616, %vm617
    %v619 = vsel %vm618, %v611, %v615
    %v620 = vand.u32 2147483647, %v595
    %vm621 = vcmp.eq.f32.partialorder %v620, 8.507059e+37
    %v622 = vand.u32 %v595, 2147483648
    %v623 = vor.u32 1.1754944e-38, %v622
    %v624 = vsel %vm621, %v623, %v619
    %v625 = vmul.f32 1.0, %v624
    %v626 = vtanh.pop %v586
    %628 = vrot.lane.b32.xlu0 %v536, 64
    %v629 = vpop.permute.xlu0 %628
    %v631 = vmul.f32 %v610, %v629
    %v632 = vmul.f32 %v610, %v626
    %634 = vrot.lane.b32.xlu0 %v632, 64
    %v635 = vpop.permute.xlu0 %634
    %v637 = vadd.f32 %v631, %v635
    %v638 = vtanh.pop %v637
    %v639 = vmul.f32 %v625, %v638
    %s640 = scalar_lea.vmem [#allocation5], 16
    %v641 = vld [vmem:[%s640] sm:$0xf]
    %vm642 = vcmp.ne.f32.partialorder %v641, 0.0
    %644 = vrot.lane.b32.xlu0 %v639, 64
    %v645 = vpop.permute.xlu0 %644
    %v647 = vsel %vm642, %v645, %v531
    %649 = vrot.lane.b32.xlu0 %v637, 64
    %v650 = vpop.permute.xlu0 %649
    %v652 = vsel %vm642, %v650, %v536
    %s653 = scalar_lea.vmem [#allocation2], 40
    %v654 = vld [vmem:[%s653] sm:$0xff]
    %656 = vst [vmem:[#allocation1] ss:$2 sm:$0xff] %v654
    %v657 = vld.sshfl [vmem:[#allocation1] sm:$0xff pattern:$0x75316420]
    %v658 = vld.sshfl [vmem:[#allocation1 + $0x8] sm:$0xff pattern:$0x75316420]
    %v662 = vsel %vm85, %v647, 0
    %664 = vmatpush.msra.mxu0 0.0
    %665 = vmatpush.msra.mxu0 0.0
    %666 = vmatpush.msra.mxu0 0.0
    %667 = vmatpush.msra.mxu0 0.0
    %668 = vmatpush.msra.mxu0 0.0
    %669 = vmatpush.msra.mxu0 0.0
    %670 = vmatpush.msra.mxu0 0.0
    %671 = vmatpush.msra.mxu0 0.0
    %672 = vmatpush.msra.mxu0 %v76
    %673 = vmatpush.msra.mxu0 %v74
    %674 = vmatpush.msra.mxu0 %v72
    %675 = vmatpush.msra.mxu0 %v70
    %676 = vmatpush.msra.mxu0 %v68
    %677 = vmatpush.msra.mxu0 %v66
    %678 = vmatpush.msra.mxu0 %v64
    %679 = vmatpush.msra.mxu0 %v62
    %680 = vmatmul.f32.gmra.mxu0 %v662
    %v681 = vpop.f32.mrf.mxu0
    %v682 = vadd.f32 %v657, %v681
    %683 = vdwg.mxu0
    %684 = vmatpush.msra.mxu0 0.0
    %685 = vmatpush.msra.mxu0 0.0
    %686 = vmatpush.msra.mxu0 0.0
    %687 = vmatpush.msra.mxu0 0.0
    %688 = vmatpush.msra.mxu0 0.0
    %689 = vmatpush.msra.mxu0 0.0
    %690 = vmatpush.msra.mxu0 0.0
    %691 = vmatpush.msra.mxu0 0.0
    %692 = vmatpush.msra.mxu0 %v77
    %693 = vmatpush.msra.mxu0 %v75
    %694 = vmatpush.msra.mxu0 %v73
    %695 = vmatpush.msra.mxu0 %v71
    %696 = vmatpush.msra.mxu0 %v69
    %697 = vmatpush.msra.mxu0 %v67
    %698 = vmatpush.msra.mxu0 %v65
    %699 = vmatpush.msra.mxu0 %v63
    %700 = vmatmul.f32.gmra.mxu0 %v662
    %v701 = vpop.f32.mrf.mxu0
    %v702 = vadd.f32 %v658, %v701
    %703 = vdwg.mxu0
    %v704 = vxor.u32 %v682, 2147483648
    %v705 = vxor.u32 %v702, 2147483648
    %v706 = vmul.f32 %v704, 1.442695
    %v707 = vpow.pop %v706
    %v708 = vmul.f32 %v705, 1.442695
    %v709 = vpow.pop %v708
    %v710 = vadd.f32 %v707, 1.0
    %v711 = vadd.f32 %v709, 1.0
    %v712 = vrcp.pop %v710
    %v713 = vmul.f32 %v710, %v712
    %v714 = vsub.f32 1.0, %v713
    %v715 = vmul.f32 %v712, %v714
    %v716 = vadd.f32 %v712, %v715
    %vm717 = vweird.f32 %v710
    %vm718 = vweird.f32 %v712
    %vm719 = vmor %vm717, %vm718
    %v720 = vsel %vm719, %v712, %v716
    %v721 = vand.u32 2147483647, %v710
    %vm722 = vcmp.eq.f32.partialorder %v721, 8.507059e+37
    %v723 = vand.u32 %v710, 2147483648
    %v724 = vor.u32 1.1754944e-38, %v723
    %v725 = vsel %vm722, %v724, %v720
    %v726 = vmul.f32 1.0, %v725
    %v727 = vrcp.pop %v711
    %v728 = vmul.f32 %v711, %v727
    %v729 = vsub.f32 1.0, %v728
    %v730 = vmul.f32 %v727, %v729
    %v731 = vadd.f32 %v727, %v730
    %vm732 = vweird.f32 %v711
    %vm733 = vweird.f32 %v727
    %vm734 = vmor %vm732, %vm733
    %v735 = vsel %vm734, %v727, %v731
    %v736 = vand.u32 2147483647, %v711
    %vm737 = vcmp.eq.f32.partialorder %v736, 8.507059e+37
    %v738 = vand.u32 %v711, 2147483648
    %v739 = vor.u32 1.1754944e-38, %v738
    %v740 = vsel %vm737, %v739, %v735
    %v741 = vmul.f32 1.0, %v740
    %v742 = vtanh.pop %v702
    %744 = vrot.lane.b32.xlu0 %v652, 64
    %v745 = vpop.permute.xlu0 %744
    %v747 = vmul.f32 %v726, %v745
    %v748 = vmul.f32 %v726, %v742
    %750 = vrot.lane.b32.xlu0 %v748, 64
    %v751 = vpop.permute.xlu0 %750
    %v753 = vadd.f32 %v747, %v751
    %v754 = vtanh.pop %v753
    %v755 = vmul.f32 %v741, %v754
    %s756 = scalar_lea.vmem [#allocation5], 20
    %v757 = vld [vmem:[%s756] sm:$0xf]
    %vm758 = vcmp.ne.f32.partialorder %v757, 0.0
    %760 = vrot.lane.b32.xlu0 %v755, 64
    %v761 = vpop.permute.xlu0 %760
    %v763 = vsel %vm758, %v761, %v647
    %765 = vrot.lane.b32.xlu0 %v753, 64
    %v766 = vpop.permute.xlu0 %765
    %v768 = vsel %vm758, %v766, %v652
    %s769 = scalar_lea.vmem [#allocation2], 48
    %v770 = vld [vmem:[%s769] sm:$0xff]
    %772 = vst [vmem:[#allocation1] ss:$2 sm:$0xff] %v770
    %v773 = vld.sshfl [vmem:[#allocation1] sm:$0xff pattern:$0x75316420]
    %v774 = vld.sshfl [vmem:[#allocation1 + $0x8] sm:$0xff pattern:$0x75316420]
    %v778 = vsel %vm85, %v763, 0
    %780 = vmatpush.msra.mxu0 0.0
    %781 = vmatpush.msra.mxu0 0.0
    %782 = vmatpush.msra.mxu0 0.0
    %783 = vmatpush.msra.mxu0 0.0
    %784 = vmatpush.msra.mxu0 0.0
    %785 = vmatpush.msra.mxu0 0.0
    %786 = vmatpush.msra.mxu0 0.0
    %787 = vmatpush.msra.mxu0 0.0
    %788 = vmatpush.msra.mxu0 %v76
    %789 = vmatpush.msra.mxu0 %v74
    %790 = vmatpush.msra.mxu0 %v72
    %791 = vmatpush.msra.mxu0 %v70
    %792 = vmatpush.msra.mxu0 %v68
    %793 = vmatpush.msra.mxu0 %v66
    %794 = vmatpush.msra.mxu0 %v64
    %795 = vmatpush.msra.mxu0 %v62
    %796 = vmatmul.f32.gmra.mxu0 %v778
    %v797 = vpop.f32.mrf.mxu0
    %v798 = vadd.f32 %v773, %v797
    %799 = vdwg.mxu0
    %800 = vmatpush.msra.mxu0 0.0
    %801 = vmatpush.msra.mxu0 0.0
    %802 = vmatpush.msra.mxu0 0.0
    %803 = vmatpush.msra.mxu0 0.0
    %804 = vmatpush.msra.mxu0 0.0
    %805 = vmatpush.msra.mxu0 0.0
    %806 = vmatpush.msra.mxu0 0.0
    %807 = vmatpush.msra.mxu0 0.0
    %808 = vmatpush.msra.mxu0 %v77
    %809 = vmatpush.msra.mxu0 %v75
    %810 = vmatpush.msra.mxu0 %v73
    %811 = vmatpush.msra.mxu0 %v71
    %812 = vmatpush.msra.mxu0 %v69
    %813 = vmatpush.msra.mxu0 %v67
    %814 = vmatpush.msra.mxu0 %v65
    %815 = vmatpush.msra.mxu0 %v63
    %816 = vmatmul.f32.gmra.mxu0 %v778
    %v817 = vpop.f32.mrf.mxu0
    %v818 = vadd.f32 %v774, %v817
    %819 = vdwg.mxu0
    %v820 = vxor.u32 %v798, 2147483648
    %v821 = vxor.u32 %v818, 2147483648
    %v822 = vmul.f32 %v820, 1.442695
    %v823 = vpow.pop %v822
    %v824 = vmul.f32 %v821, 1.442695
    %v825 = vpow.pop %v824
    %v826 = vadd.f32 %v823, 1.0
    %v827 = vadd.f32 %v825, 1.0
    %v828 = vrcp.pop %v826
    %v829 = vmul.f32 %v826, %v828
    %v830 = vsub.f32 1.0, %v829
    %v831 = vmul.f32 %v828, %v830
    %v832 = vadd.f32 %v828, %v831
    %vm833 = vweird.f32 %v826
    %vm834 = vweird.f32 %v828
    %vm835 = vmor %vm833, %vm834
    %v836 = vsel %vm835, %v828, %v832
    %v837 = vand.u32 2147483647, %v826
    %vm838 = vcmp.eq.f32.partialorder %v837, 8.507059e+37
    %v839 = vand.u32 %v826, 2147483648
    %v840 = vor.u32 1.1754944e-38, %v839
    %v841 = vsel %vm838, %v840, %v836
    %v842 = vmul.f32 1.0, %v841
    %v843 = vrcp.pop %v827
    %v844 = vmul.f32 %v827, %v843
    %v845 = vsub.f32 1.0, %v844
    %v846 = vmul.f32 %v843, %v845
    %v847 = vadd.f32 %v843, %v846
    %vm848 = vweird.f32 %v827
    %vm849 = vweird.f32 %v843
    %vm850 = vmor %vm848, %vm849
    %v851 = vsel %vm850, %v843, %v847
    %v852 = vand.u32 2147483647, %v827
    %vm853 = vcmp.eq.f32.partialorder %v852, 8.507059e+37
    %v854 = vand.u32 %v827, 2147483648
    %v855 = vor.u32 1.1754944e-38, %v854
    %v856 = vsel %vm853, %v855, %v851
    %v857 = vmul.f32 1.0, %v856
    %v858 = vtanh.pop %v818
    %860 = vrot.lane.b32.xlu0 %v768, 64
    %v861 = vpop.permute.xlu0 %860
    %v863 = vmul.f32 %v842, %v861
    %v864 = vmul.f32 %v842, %v858
    %866 = vrot.lane.b32.xlu0 %v864, 64
    %v867 = vpop.permute.xlu0 %866
    %v869 = vadd.f32 %v863, %v867
    %v870 = vtanh.pop %v869
    %v871 = vmul.f32 %v857, %v870
    %s872 = scalar_lea.vmem [#allocation5], 24
    %v873 = vld [vmem:[%s872] sm:$0xf]
    %vm874 = vcmp.ne.f32.partialorder %v873, 0.0
    %876 = vrot.lane.b32.xlu0 %v871, 64
    %v877 = vpop.permute.xlu0 %876
    %v879 = vsel %vm874, %v877, %v763
    %881 = vrot.lane.b32.xlu0 %v869, 64
    %v882 = vpop.permute.xlu0 %881
    %v884 = vsel %vm874, %v882, %v768
    %s885 = scalar_lea.vmem [#allocation2], 56
    %v886 = vld [vmem:[%s885] sm:$0xff]
    %888 = vst [vmem:[#allocation1] ss:$2 sm:$0xff] %v886
    %v889 = vld.sshfl [vmem:[#allocation1] sm:$0xff pattern:$0x75316420]
    %v890 = vld.sshfl [vmem:[#allocation1 + $0x8] sm:$0xff pattern:$0x75316420]
    %v894 = vsel %vm85, %v879, 0
    %896 = vmatpush.msra.mxu0 0.0
    %897 = vmatpush.msra.mxu0 0.0
    %898 = vmatpush.msra.mxu0 0.0
    %899 = vmatpush.msra.mxu0 0.0
    %900 = vmatpush.msra.mxu0 0.0
    %901 = vmatpush.msra.mxu0 0.0
    %902 = vmatpush.msra.mxu0 0.0
    %903 = vmatpush.msra.mxu0 0.0
    %904 = vmatpush.msra.mxu0 %v76
    %905 = vmatpush.msra.mxu0 %v74
    %906 = vmatpush.msra.mxu0 %v72
    %907 = vmatpush.msra.mxu0 %v70
    %908 = vmatpush.msra.mxu0 %v68
    %909 = vmatpush.msra.mxu0 %v66
    %910 = vmatpush.msra.mxu0 %v64
    %911 = vmatpush.msra.mxu0 %v62
    %912 = vmatmul.f32.gmra.mxu0 %v894
    %v913 = vpop.f32.mrf.mxu0
    %v914 = vadd.f32 %v889, %v913
    %915 = vdwg.mxu0
    %916 = vmatpush.msra.mxu0 0.0
    %917 = vmatpush.msra.mxu0 0.0
    %918 = vmatpush.msra.mxu0 0.0
    %919 = vmatpush.msra.mxu0 0.0
    %920 = vmatpush.msra.mxu0 0.0
    %921 = vmatpush.msra.mxu0 0.0
    %922 = vmatpush.msra.mxu0 0.0
    %923 = vmatpush.msra.mxu0 0.0
    %924 = vmatpush.msra.mxu0 %v77
    %925 = vmatpush.msra.mxu0 %v75
    %926 = vmatpush.msra.mxu0 %v73
    %927 = vmatpush.msra.mxu0 %v71
    %928 = vmatpush.msra.mxu0 %v69
    %929 = vmatpush.msra.mxu0 %v67
    %930 = vmatpush.msra.mxu0 %v65
    %931 = vmatpush.msra.mxu0 %v63
    %932 = vmatmul.f32.gmra.mxu0 %v894
    %v933 = vpop.f32.mrf.mxu0
    %v934 = vadd.f32 %v890, %v933
    %935 = vdwg.mxu0
    %v936 = vxor.u32 %v914, 2147483648
    %v937 = vxor.u32 %v934, 2147483648
    %v938 = vmul.f32 %v936, 1.442695
    %v939 = vpow.pop %v938
    %v940 = vmul.f32 %v937, 1.442695
    %v941 = vpow.pop %v940
    %v942 = vadd.f32 %v939, 1.0
    %v943 = vadd.f32 %v941, 1.0
    %v944 = vrcp.pop %v942
    %v945 = vmul.f32 %v942, %v944
    %v946 = vsub.f32 1.0, %v945
    %v947 = vmul.f32 %v944, %v946
    %v948 = vadd.f32 %v944, %v947
    %vm949 = vweird.f32 %v942
    %vm950 = vweird.f32 %v944
    %vm951 = vmor %vm949, %vm950
    %v952 = vsel %vm951, %v944, %v948
    %v953 = vand.u32 2147483647, %v942
    %vm954 = vcmp.eq.f32.partialorder %v953, 8.507059e+37
    %v955 = vand.u32 %v942, 2147483648
    %v956 = vor.u32 1.1754944e-38, %v955
    %v957 = vsel %vm954, %v956, %v952
    %v958 = vmul.f32 1.0, %v957
    %v959 = vrcp.pop %v943
    %v960 = vmul.f32 %v943, %v959
    %v961 = vsub.f32 1.0, %v960
    %v962 = vmul.f32 %v959, %v961
    %v963 = vadd.f32 %v959, %v962
    %vm964 = vweird.f32 %v943
    %vm965 = vweird.f32 %v959
    %vm966 = vmor %vm964, %vm965
    %v967 = vsel %vm966, %v959, %v963
    %v968 = vand.u32 2147483647, %v943
    %vm969 = vcmp.eq.f32.partialorder %v968, 8.507059e+37
    %v970 = vand.u32 %v943, 2147483648
    %v971 = vor.u32 1.1754944e-38, %v970
    %v972 = vsel %vm969, %v971, %v967
    %v973 = vmul.f32 1.0, %v972
    %v974 = vtanh.pop %v934
    %976 = vrot.lane.b32.xlu0 %v884, 64
    %v977 = vpop.permute.xlu0 %976
    %v979 = vmul.f32 %v958, %v977
    %v980 = vmul.f32 %v958, %v974
    %982 = vrot.lane.b32.xlu0 %v980, 64
    %v983 = vpop.permute.xlu0 %982
    %v985 = vadd.f32 %v979, %v983
    %v986 = vtanh.pop %v985
    %v987 = vmul.f32 %v973, %v986
    %s988 = scalar_lea.vmem [#allocation5], 28
    %v989 = vld [vmem:[%s988] sm:$0xf]
    %vm990 = vcmp.ne.f32.partialorder %v989, 0.0
    %992 = vrot.lane.b32.xlu0 %v987, 64
    %v993 = vpop.permute.xlu0 %992
    %v995 = vsel %vm990, %v993, %v879
    %997 = vrot.lane.b32.xlu0 %v985, 64
    %v998 = vpop.permute.xlu0 %997
    %v1000 = vsel %vm990, %v998, %v884
    %s1001 = scalar_lea.vmem [#allocation2], 64
    %v1002 = vld [vmem:[%s1001] sm:$0xff]
    %1004 = vst [vmem:[#allocation1] ss:$2 sm:$0xff] %v1002
    %v1005 = vld.sshfl [vmem:[#allocation1] sm:$0xff pattern:$0x75316420]
    %v1006 = vld.sshfl [vmem:[#allocation1 + $0x8] sm:$0xff pattern:$0x75316420]
    %v1010 = vsel %vm85, %v995, 0
    %1012 = vmatpush.msra.mxu0 0.0
    %1013 = vmatpush.msra.mxu0 0.0
    %1014 = vmatpush.msra.mxu0 0.0
    %1015 = vmatpush.msra.mxu0 0.0
    %1016 = vmatpush.msra.mxu0 0.0
    %1017 = vmatpush.msra.mxu0 0.0
    %1018 = vmatpush.msra.mxu0 0.0
    %1019 = vmatpush.msra.mxu0 0.0
    %1020 = vmatpush.msra.mxu0 %v76
    %1021 = vmatpush.msra.mxu0 %v74
    %1022 = vmatpush.msra.mxu0 %v72
    %1023 = vmatpush.msra.mxu0 %v70
    %1024 = vmatpush.msra.mxu0 %v68
    %1025 = vmatpush.msra.mxu0 %v66
    %1026 = vmatpush.msra.mxu0 %v64
    %1027 = vmatpush.msra.mxu0 %v62
    %1028 = vmatmul.f32.gmra.mxu0 %v1010
    %v1029 = vpop.f32.mrf.mxu0
    %v1030 = vadd.f32 %v1005, %v1029
    %1031 = vdwg.mxu0
    %1032 = vmatpush.msra.mxu0 0.0
    %1033 = vmatpush.msra.mxu0 0.0
    %1034 = vmatpush.msra.mxu0 0.0
    %1035 = vmatpush.msra.mxu0 0.0
    %1036 = vmatpush.msra.mxu0 0.0
    %1037 = vmatpush.msra.mxu0 0.0
    %1038 = vmatpush.msra.mxu0 0.0
    %1039 = vmatpush.msra.mxu0 0.0
    %1040 = vmatpush.msra.mxu0 %v77
    %1041 = vmatpush.msra.mxu0 %v75
    %1042 = vmatpush.msra.mxu0 %v73
    %1043 = vmatpush.msra.mxu0 %v71
    %1044 = vmatpush.msra.mxu0 %v69
    %1045 = vmatpush.msra.mxu0 %v67
    %1046 = vmatpush.msra.mxu0 %v65
    %1047 = vmatpush.msra.mxu0 %v63
    %1048 = vmatmul.f32.gmra.mxu0 %v1010
    %v1049 = vpop.f32.mrf.mxu0
    %v1050 = vadd.f32 %v1006, %v1049
    %1051 = vdwg.mxu0
    %v1052 = vxor.u32 %v1030, 2147483648
    %v1053 = vxor.u32 %v1050, 2147483648
    %v1054 = vmul.f32 %v1052, 1.442695
    %v1055 = vpow.pop %v1054
    %v1056 = vmul.f32 %v1053, 1.442695
    %v1057 = vpow.pop %v1056
    %v1058 = vadd.f32 %v1055, 1.0
    %v1059 = vadd.f32 %v1057, 1.0
    %v1060 = vrcp.pop %v1058
    %v1061 = vmul.f32 %v1058, %v1060
    %v1062 = vsub.f32 1.0, %v1061
    %v1063 = vmul.f32 %v1060, %v1062
    %v1064 = vadd.f32 %v1060, %v1063
    %vm1065 = vweird.f32 %v1058
    %vm1066 = vweird.f32 %v1060
    %vm1067 = vmor %vm1065, %vm1066
    %v1068 = vsel %vm1067, %v1060, %v1064
    %v1069 = vand.u32 2147483647, %v1058
    %vm1070 = vcmp.eq.f32.partialorder %v1069, 8.507059e+37
    %v1071 = vand.u32 %v1058, 2147483648
    %v1072 = vor.u32 1.1754944e-38, %v1071
    %v1073 = vsel %vm1070, %v1072, %v1068
    %v1074 = vmul.f32 1.0, %v1073
    %v1075 = vrcp.pop %v1059
    %v1076 = vmul.f32 %v1059, %v1075
    %v1077 = vsub.f32 1.0, %v1076
    %v1078 = vmul.f32 %v1075, %v1077
    %v1079 = vadd.f32 %v1075, %v1078
    %vm1080 = vweird.f32 %v1059
    %vm1081 = vweird.f32 %v1075
    %vm1082 = vmor %vm1080, %vm1081
    %v1083 = vsel %vm1082, %v1075, %v1079
    %v1084 = vand.u32 2147483647, %v1059
    %vm1085 = vcmp.eq.f32.partialorder %v1084, 8.507059e+37
    %v1086 = vand.u32 %v1059, 2147483648
    %v1087 = vor.u32 1.1754944e-38, %v1086
    %v1088 = vsel %vm1085, %v1087, %v1083
    %v1089 = vmul.f32 1.0, %v1088
    %v1090 = vtanh.pop %v1050
    %1092 = vrot.lane.b32.xlu0 %v1000, 64
    %v1093 = vpop.permute.xlu0 %1092
    %v1095 = vmul.f32 %v1074, %v1093
    %v1096 = vmul.f32 %v1074, %v1090
    %1098 = vrot.lane.b32.xlu0 %v1096, 64
    %v1099 = vpop.permute.xlu0 %1098
    %v1101 = vadd.f32 %v1095, %v1099
    %v1102 = vtanh.pop %v1101
    %v1103 = vmul.f32 %v1089, %v1102
    %s1104 = scalar_lea.vmem [#allocation5], 32
    %v1105 = vld [vmem:[%s1104] sm:$0xf]
    %vm1106 = vcmp.ne.f32.partialorder %v1105, 0.0
    %1108 = vrot.lane.b32.xlu0 %v1103, 64
    %v1109 = vpop.permute.xlu0 %1108
    %v1111 = vsel %vm1106, %v1109, %v995
    %1113 = vrot.lane.b32.xlu0 %v1111, 96
    %v1114 = vpop.permute.xlu0 %1113
    %vm1116 = vcmask 257024
    %1117 = vst.msk [vmem:[#allocation8] sm:$0xf] %vm1116, %v1114
    // Predicated region
    $region26: #{tpu_custom_call.1} parent=1 // pred_check
      _
    $region27: #{tpu_custom_call.1} parent=1 // pred_check_branch
      %1119 = sbr.rel (0) target = $region29
    $region28: #{tpu_custom_call.1} parent=1 // pred_region
      %1121 = vsyncadd [#allocation4], 0
      %s1123 = sshll.u32 [#allocation8], 4
      %s1124 = int_to_ptr.vmem [resolvable:$true] %s1123
      %s1125 = sshll.u32 %s3, 4
      %s1126 = int_to_ptr.hbm [resolvable:$true] %s1125
      %1128 = dma.vmem_to_hbm [thread:$0]  %s1124, 64, %s1126, [#allocation4]
    $region29: #{tpu_custom_call.1} parent=1 // pred_fallthru
      _
    // Predicated region
    $region30: #{tpu_custom_call.1} parent=1 // pred_check
      _
    $region31: #{tpu_custom_call.1} parent=1 // pred_check_branch
      %1130 = sbr.rel (0) target = $region33
    $region32: #{tpu_custom_call.1} parent=1 // pred_region
      %1132 = dma.done [#allocation4], 64
    $region33: #{tpu_custom_call.1} parent=1 // pred_fallthru
      _
    %1133 = vsyncpa [#allocation3], 1
    %1134 = vsyncpa [#allocation6], 1
    %1135 = vsyncpa [#allocation4], 1

</llo_original>
